<compile_context>
chip_gen: v7x
topology: tpu7x:2x2x1
jax: 0.10.0
libtpu: 0.0.40
codegen_flags: <defaults>
</compile_context>

<pallas_src>
import functools

import jax
import jax.numpy as jnp
import numpy as np
from jax.experimental import pallas as pl
from jax.experimental.pallas import tpu as pltpu


# ---------------------------------------------------------------------------
# Fused Pallas kernel: bidirectional LSTM recurrence + attention + output Linear.
# ---------------------------------------------------------------------------
def _bilstm_attn_kernel(x_ref, wcat_ref, whhw_ref, b_ref, selfb_ref, womega_ref,
                        urep_ref, dmask_ref, gsel_ref, selrep_ref, selmask_ref,
                        wout_ref, bout_ref,
                        out_ref,
                        xw_sc,
                        *, batch, batch_pad, seq, hidden, attn):
    B, Bp, S, H = batch, batch_pad, seq, hidden
    D = 2 * H            # per-timestep hidden width: [fwd | bwd]
    G = 4 * D            # gate width: [i | f | g | o], each D lanes
    N = S * B            # number of real (time, batch) rows of lstm_output

    # ---- fused input projection for BOTH directions: one MXU pass over x ----
    xw_sc[...] = jnp.dot(x_ref[...], wcat_ref[...],
                         preferred_element_type=jnp.float32)          # (S*Bp, 2G) f32

    # ---- pre-sum fwd(t) + bwd(S-1-t) + bias, overwriting cols [0:G] in place ----
    # (reads always see the original matmul output: block-t cols[0:G] is read before it
    #  is written, cols[G:2G] are never written)
    bias = jnp.broadcast_to(b_ref[...], (Bp, G))                       # hoisted broadcast
    for t in range(S):
        tr = S - 1 - t
        xw_sc[t * Bp:(t + 1) * Bp, 0:G] = (
            xw_sc[t * Bp:(t + 1) * Bp, 0:G]
            + xw_sc[tr * Bp:(tr + 1) * Bp, G:2 * G]
            + bias)

    # ---- constant lane masks (hoisted out of the recurrence) ----
    lane_g = jax.lax.broadcasted_iota(jnp.int32, (Bp, G), 1)
    g_mask = (lane_g >= 2 * D) & (lane_g < 3 * D)                      # tanh gate block
    lane_w = jax.lax.broadcasted_iota(jnp.int32, (Bp, 2 * D), 1)
    first_half = lane_w < D

    whh = whhw_ref[...]                                                # (2D, G) bf16, rows [D:2D] = 0

    # ---- fully unrolled bidirectional recurrence (wide replicated state) ----
    # h_w / c_w are (Bp, 2D) with the true (Bp, D) value replicated in both 128-lane
    # halves, so every per-step slice is vreg-aligned and half-swaps go to the XLU.
    h_w = jnp.zeros((Bp, 2 * D), jnp.float32)
    c_w = jnp.zeros((Bp, 2 * D), jnp.float32)
    hs = []
    for t in range(S):
        gates = (xw_sc[t * Bp:(t + 1) * Bp, 0:G]
                 + jnp.dot(h_w.astype(jnp.bfloat16), whh,
                           preferred_element_type=jnp.float32))        # (Bp, G) f32
        # full-width activations on the EUP, blended with a constant lane mask
        acts = jnp.where(g_mask, jnp.tanh(gates), jax.nn.sigmoid(gates))
        lo = acts[:, 0:2 * D]              # [sig(i) | sig(f)]   vreg-aligned
        hi = acts[:, 2 * D:4 * D]          # [tanh(g)| sig(o)]   vreg-aligned
        p1 = lo * hi                       # [sig(i)*tanh(g) | sig(f)*sig(o)]
        p2 = lo * c_w                      # [sig(i)*c       | sig(f)*c     ]
        q = p1 + pltpu.roll(p2, shift=D, axis=1)          # lanes [0:D] = new cell state
        c_w = jnp.where(first_half, q, pltpu.roll(q, shift=D, axis=1))        # [c | c]
        o_rep = jnp.where(first_half, pltpu.roll(hi, shift=D, axis=1), hi)    # [o | o]
        h_w = o_rep * jnp.tanh(c_w)                                           # [h | h]
        hs.append(h_w)                     # register-resident lstm_output tiles

    # ---- attention_net + output Linear (reference reshape semantics) ----
    # flat row k = t*B + b; cols [0:H]=fwd(t), [H:D]=bwd(t); cols [D:2D] are the
    # replicated junk copy and are killed by zero rows in w_omega_ext / wout_ext.
    allh = jnp.concatenate(hs, axis=0).astype(jnp.bfloat16)            # (S*Bp, 2D)
    flat_fb = jnp.dot(selfb_ref[...], allh,
                      preferred_element_type=jnp.float32)              # (2N, 2D)
    fwd_cols = jax.lax.broadcasted_iota(jnp.int32, (N, 2 * D), 1) < H
    flat = jnp.where(fwd_cols, flat_fb[0:N, :], flat_fb[N:2 * N, :])   # (N, 2D) f32
    flat16 = flat.astype(jnp.bfloat16)

    att_tanh = jnp.tanh(jnp.dot(flat16, womega_ref[...],
                                preferred_element_type=jnp.float32))   # (N, A)
    # scores via MXU (no reshapes / no cross-lane layout shuffles):
    #   score_flat[k] replicated over S columns, diagonal-masked, group-summed
    scores_rep = jnp.dot(att_tanh, urep_ref[...],
                         preferred_element_type=jnp.float32)           # (N, S)
    scores = jnp.dot(gsel_ref[...], scores_rep * dmask_ref[...],
                     preferred_element_type=jnp.float32)               # (B, S)
    # max-subtraction is mathematically a no-op for softmax; added for robustness
    m = jnp.max(scores, axis=1, keepdims=True)
    exps = jnp.exp(scores - m)
    denom = jnp.sum(exps, axis=1, keepdims=True)
    alphas = exps * pl.reciprocal(denom)                               # exact reciprocal

    # attn_out[b, :] = sum_t alphas[b, t] * flat[t*B + b, :]
    weights = (jnp.dot(alphas, selrep_ref[...],
                       preferred_element_type=jnp.float32)
               * selmask_ref[...])                                     # (B, N)
    attn_out = jnp.dot(weights.astype(jnp.bfloat16), flat16,
                       preferred_element_type=jnp.float32)             # (B, 2D)
    out_ref[...] = (jnp.dot(attn_out.astype(jnp.bfloat16), wout_ref[...],
                            preferred_element_type=jnp.float32)
                    + bout_ref[...])                                   # (B, O)


# ---------------------------------------------------------------------------
# Weight packing (trace-time, plain JAX) for the fused kernel layout.
# ---------------------------------------------------------------------------
def _pack_lstm_weights(params, *, hidden):
    """Gate-column order along the 8H axis: [i_f,i_b | f_f,f_b | g_f,g_b | o_f,o_b]."""
    H = hidden
    E = params["wih_f"].shape[1]
    wih_f = jnp.zeros((E, 8 * H), jnp.float32)
    wih_b = jnp.zeros((E, 8 * H), jnp.float32)
    whh = jnp.zeros((2 * H, 8 * H), jnp.float32)
    bias = jnp.zeros((1, 8 * H), jnp.float32)
    for g in range(4):
        c0 = g * 2 * H
        wih_f = wih_f.at[:, c0:c0 + H].set(params["wih_f"][g])
        wih_b = wih_b.at[:, c0 + H:c0 + 2 * H].set(params["wih_b"][g])
        whh = whh.at[0:H, c0:c0 + H].set(params["whh_f"][g])
        whh = whh.at[H:2 * H, c0 + H:c0 + 2 * H].set(params["whh_b"][g])
        bias = bias.at[:, c0:c0 + H].set(params["b_f"][g])
        bias = bias.at[:, c0 + H:c0 + 2 * H].set(params["b_b"][g])
    return wih_f, wih_b, whh, bias


def _attention_constants(batch, batch_pad, seq):
    """Constant 0/1 matrices encoding the reference's flat-index bookkeeping."""
    B, Bp, S = batch, batch_pad, seq
    N = S * B
    sel_f = np.zeros((N, S * Bp), np.float32)     # pick fwd half: row t*Bp + b
    sel_b = np.zeros((N, S * Bp), np.float32)     # pick bwd half: row (S-1-t)*Bp + b
    dmask = np.zeros((N, S), np.float32)          # keep column k % S of the replicated scores
    gsel = np.zeros((B, N), np.float32)           # group-sum: quirky batch row k // S
    sel_rep = np.zeros((S, N), np.float32)        # column j belongs to time j // B
    sel_mask = np.zeros((B, N), np.float32)       # column j belongs to batch j % B
    for k in range(N):
        t, b = k // B, k % B
        sel_f[k, t * Bp + b] = 1.0
        sel_b[k, (S - 1 - t) * Bp + b] = 1.0
        dmask[k, k % S] = 1.0
        gsel[k // S, k] = 1.0
        sel_rep[t, k] = 1.0
        sel_mask[b, k] = 1.0
    sel_fb = np.concatenate([sel_f, sel_b], axis=0)           # fused into one matmul
    return (jnp.asarray(sel_fb, jnp.bfloat16), jnp.asarray(dmask), jnp.asarray(gsel),
            jnp.asarray(sel_rep), jnp.asarray(sel_mask))


# ---------------------------------------------------------------------------
# Forward pass wrapper (embedding gather + packing in XLA, everything else fused).
# ---------------------------------------------------------------------------
def bilstm_attn_forward(tokens, params, *, seq_len, attn_size, hidden):
    B, S = tokens.shape
    assert S == seq_len
    H = hidden
    D = 2 * H
    G = 4 * D
    Bp = max(8, ((B + 7) // 8) * 8)               # pad batch to sublane width
    O = params["wout_t"].shape[1]

    # glue (XLA): embedding gather + time-major flatten + batch padding
    emb = params["emb"][tokens]                                   # (B, S, E)
    x_seq = jnp.transpose(emb, (1, 0, 2))                         # (S, B, E)
    x_pad = jnp.pad(x_seq, ((0, 0), (0, Bp - B), (0, 0)))         # (S, Bp, E)
    x_flat = x_pad.reshape(S * Bp, -1).astype(jnp.bfloat16)       # (S*Bp, E) bf16 MXU operand

    wih_f, wih_b, whh, bias = _pack_lstm_weights(params, hidden=H)
    wcat = jnp.concatenate([wih_f, wih_b], axis=1).astype(jnp.bfloat16)          # (E, 2G)
    whh_w = jnp.concatenate([whh, jnp.zeros_like(whh)], axis=0).astype(jnp.bfloat16)   # (2D, G)
    womega_ext = jnp.concatenate(
        [params["w_omega"], jnp.zeros_like(params["w_omega"])], axis=0).astype(jnp.bfloat16)  # (2D, A)
    wout_ext = jnp.concatenate(
        [params["wout_t"], jnp.zeros_like(params["wout_t"])], axis=0).astype(jnp.bfloat16)    # (2D, O)
    u_rep = jnp.tile(params["u_omega_row"].reshape(-1, 1), (1, S)).astype(jnp.float32)        # (A, S)

    sel_fb, dmask, gsel, sel_rep, sel_mask = _attention_constants(B, Bp, S)

    kernel = functools.partial(_bilstm_attn_kernel, batch=B, batch_pad=Bp,
                               seq=S, hidden=H, attn=attn_size)
    return pl.pallas_call(
        kernel,
        out_shape=jax.ShapeDtypeStruct((B, O), jnp.float32),
        scratch_shapes=[
            pltpu.VMEM((S * Bp, 2 * G), jnp.float32),   # fused input projection / pre-summed gates
        ],
        compiler_params=pltpu.CompilerParams(
            vmem_limit_bytes=32 * 1024 * 1024),          # explicit budget; usage ~0.2 MiB
    )(x_flat, wcat, whh_w, bias, sel_fb, womega_ext, u_rep, dmask, gsel,
      sel_rep, sel_mask, wout_ext, params["bout_row"])


# ---------------------------------------------------------------------------
# Pure-JAX reference (mirrors the PyTorch module op-for-op, f32) for validation.
# ---------------------------------------------------------------------------
def _ref_lstm_dir(x_seq, wih, whh, b):
    S, B, E = x_seq.shape
    H = whh.shape[2]

    def step(carry, x_t):
        h, c = carry
        g = [x_t @ wih[k] + h @ whh[k] + b[k] for k in range(4)]
        i = jax.nn.sigmoid(g[0]); f = jax.nn.sigmoid(g[1])
        gg = jnp.tanh(g[2]); o = jax.nn.sigmoid(g[3])
        c = f * c + i * gg
        h = o * jnp.tanh(c)
        return (h, c), h

    init = (jnp.zeros((B, H), jnp.float32), jnp.zeros((B, H), jnp.float32))
    _, hs = jax.lax.scan(step, init, x_seq)
    return hs


def reference_forward(tokens, params, *, seq_len):
    emb = params["emb"][tokens]
    x_seq = jnp.transpose(emb, (1, 0, 2))
    out_f = _ref_lstm_dir(x_seq, params["wih_f"], params["whh_f"], params["b_f"])
    out_b = _ref_lstm_dir(x_seq[::-1], params["wih_b"], params["whh_b"], params["b_b"])[::-1]
    lstm_output = jnp.concatenate([out_f, out_b], axis=-1)   # (S, B, D)
    D = lstm_output.shape[-1]
    flat = lstm_output.reshape(-1, D)
    att_tanh = jnp.tanh(flat @ params["w_omega"])
    scores = att_tanh @ params["u_omega_row"].reshape(-1, 1)
    exps = jnp.exp(scores).reshape(-1, seq_len)
    alphas = exps / jnp.sum(exps, axis=1, keepdims=True)
    alphas_r = alphas.reshape(-1, seq_len, 1)
    state = jnp.transpose(lstm_output, (1, 0, 2))
    attn_out = jnp.sum(state * alphas_r, axis=1)
    return attn_out @ params["wout_t"] + params["bout_row"]


# ---------------------------------------------------------------------------
# Deterministic parameter construction + driver.
# ---------------------------------------------------------------------------
def make_params(key, *, vocab, emb_size, hidden, out_size, attn_size):
    ks = jax.random.split(key, 16)
    k_lstm = 1.0 / np.sqrt(hidden)
    D = 2 * hidden

    def u(k, shape, lim):
        return jax.random.uniform(k, shape, jnp.float32, minval=-lim, maxval=lim)

    params = {
        "emb": u(ks[0], (vocab, emb_size), 1.0),
        # forward direction (per-gate, PyTorch (i, f, g, o) order, pre-transposed for x @ W)
        "wih_f": u(ks[1], (4, emb_size, hidden), k_lstm),
        "whh_f": u(ks[2], (4, hidden, hidden), k_lstm),
        "b_f": u(ks[3], (4, 1, hidden), k_lstm) + u(ks[4], (4, 1, hidden), k_lstm),
        # backward direction
        "wih_b": u(ks[5], (4, emb_size, hidden), k_lstm),
        "whh_b": u(ks[6], (4, hidden, hidden), k_lstm),
        "b_b": u(ks[7], (4, 1, hidden), k_lstm) + u(ks[8], (4, 1, hidden), k_lstm),
        # attention (module inits these to zeros; random here to exercise the kernel)
        "w_omega": 0.1 * jax.random.normal(ks[9], (D, attn_size), jnp.float32),
        "u_omega_row": 0.1 * jax.random.normal(ks[10], (1, attn_size), jnp.float32),
        # output Linear (stored transposed for attn_out @ W^T)
        "wout_t": u(ks[11], (D, out_size), 1.0 / np.sqrt(D)),
        "bout_row": u(ks[12], (1, out_size), 1.0 / np.sqrt(D)),
    }
    return params


if __name__ == "__main__":
    VOCAB, EMB, HIDDEN, OUT = 50, 32, 32, 4
    BATCH, SEQ, ATTN = 2, 8, 16

    key = jax.random.PRNGKey(0)
    k_tok, k_par = jax.random.split(key)
    tokens = jax.random.randint(k_tok, (BATCH, SEQ), 0, VOCAB, dtype=jnp.int32)
    params = make_params(k_par, vocab=VOCAB, emb_size=EMB, hidden=HIDDEN,
                         out_size=OUT, attn_size=ATTN)

    fwd = jax.jit(functools.partial(bilstm_attn_forward,
                                    seq_len=SEQ, attn_size=ATTN, hidden=HIDDEN))
    logits = jax.block_until_ready(fwd(tokens, params))

    ref = jax.block_until_ready(reference_forward(tokens, params, seq_len=SEQ))
    # Kernel uses bf16 MXU operands (f32 accumulate / f32 state); reference is pure f32,
    # so compare at bf16-appropriate tolerance.
    np.testing.assert_allclose(np.asarray(logits), np.asarray(ref),
                               rtol=2e-2, atol=2e-2)

    print("KERNEL_OK")
</pallas_src>

<mosaic_0001>
module attributes {stable_mosaic.version = 11 : i64} {
  func.func @_bilstm_attn_kernel(%arg0: memref<64x32xbf16, #tpu.memory_space<vmem>>, %arg1: memref<32x512xbf16, #tpu.memory_space<vmem>>, %arg2: memref<128x256xbf16, #tpu.memory_space<vmem>>, %arg3: memref<1x256xf32, #tpu.memory_space<vmem>>, %arg4: memref<32x64xbf16, #tpu.memory_space<vmem>>, %arg5: memref<128x16xbf16, #tpu.memory_space<vmem>>, %arg6: memref<16x8xf32, #tpu.memory_space<vmem>>, %arg7: memref<16x8xf32, #tpu.memory_space<vmem>>, %arg8: memref<2x16xf32, #tpu.memory_space<vmem>>, %arg9: memref<8x16xf32, #tpu.memory_space<vmem>>, %arg10: memref<2x16xf32, #tpu.memory_space<vmem>>, %arg11: memref<128x4xbf16, #tpu.memory_space<vmem>>, %arg12: memref<1x4xf32, #tpu.memory_space<vmem>>, %arg13: memref<2x4xf32, #tpu.memory_space<vmem>>, %arg14: memref<64x512xf32, #tpu.memory_space<vmem>>) attributes {dimension_semantics = [], scalar_prefetch = 0 : i64, scratch_operands = 1 : i64, tpu.core_type = #tpu.core_type<tc>} {
    %c0 = arith.constant 0 : index
    %c0_0 = arith.constant 0 : index
    %0 = vector.load %arg0[%c0, %c0_0] : memref<64x32xbf16, #tpu.memory_space<vmem>>, vector<64x32xbf16>
    %c0_1 = arith.constant 0 : index
    %c0_2 = arith.constant 0 : index
    %1 = vector.load %arg1[%c0_1, %c0_2] : memref<32x512xbf16, #tpu.memory_space<vmem>>, vector<32x512xbf16>
    %cst = arith.constant dense<0.000000e+00> : vector<64x512xf32>
    %2 = tpu.matmul %0, %1, %cst {dimension_numbers = #tpu.dot_dimension_numbers<[1], [0], [0], [1], [0, 0, 1, 1], [], []>} : vector<64x32xbf16>, vector<32x512xbf16>, vector<64x512xf32> -> vector<64x512xf32>
    %c0_3 = arith.constant 0 : index
    %c0_4 = arith.constant 0 : index
    %3 = vector.load %arg14[%c0_3, %c0_4] : memref<64x512xf32, #tpu.memory_space<vmem>>, vector<64x512xf32>
    tpu.vector_store %arg14[%c0_3, %c0_4], %2 {strides = array<i32>} : memref<64x512xf32, #tpu.memory_space<vmem>>, vector<64x512xf32>,
    %c0_5 = arith.constant 0 : index
    %c0_6 = arith.constant 0 : index
    %4 = vector.load %arg3[%c0_5, %c0_6] : memref<1x256xf32, #tpu.memory_space<vmem>>, vector<1x256xf32>
    %5 = vector.shape_cast %4 : vector<1x256xf32> to vector<1x256xf32>
    %6 = vector.broadcast %5 : vector<1x256xf32> to vector<8x256xf32>
    %c0_7 = arith.constant 0 : index
    %c0_8 = arith.constant 0 : index
    %7 = vector.load %arg14[%c0_7, %c0_8] : memref<64x512xf32, #tpu.memory_space<vmem>>, vector<8x256xf32>
    %c56 = arith.constant 56 : index
    %c256 = arith.constant 256 : index
    %8 = vector.load %arg14[%c56, %c256] : memref<64x512xf32, #tpu.memory_space<vmem>>, vector<8x256xf32>
    %9 = arith.addf %7, %8 : vector<8x256xf32>
    %10 = arith.addf %9, %6 : vector<8x256xf32>
    %c0_9 = arith.constant 0 : index
    %c0_10 = arith.constant 0 : index
    %11 = vector.load %arg14[%c0_9, %c0_10] : memref<64x512xf32, #tpu.memory_space<vmem>>, vector<8x256xf32>
    tpu.vector_store %arg14[%c0_9, %c0_10], %10 {strides = array<i32>} : memref<64x512xf32, #tpu.memory_space<vmem>>, vector<8x256xf32>,
    %c8 = arith.constant 8 : index
    %c0_11 = arith.constant 0 : index
    %12 = vector.load %arg14[%c8, %c0_11] : memref<64x512xf32, #tpu.memory_space<vmem>>, vector<8x256xf32>
    %c48 = arith.constant 48 : index
    %c256_12 = arith.constant 256 : index
    %13 = vector.load %arg14[%c48, %c256_12] : memref<64x512xf32, #tpu.memory_space<vmem>>, vector<8x256xf32>
    %14 = arith.addf %12, %13 : vector<8x256xf32>
    %15 = arith.addf %14, %6 : vector<8x256xf32>
    %c8_13 = arith.constant 8 : index
    %c0_14 = arith.constant 0 : index
    %16 = vector.load %arg14[%c8_13, %c0_14] : memref<64x512xf32, #tpu.memory_space<vmem>>, vector<8x256xf32>
    tpu.vector_store %arg14[%c8_13, %c0_14], %15 {strides = array<i32>} : memref<64x512xf32, #tpu.memory_space<vmem>>, vector<8x256xf32>,
    %c16 = arith.constant 16 : index
    %c0_15 = arith.constant 0 : index
    %17 = vector.load %arg14[%c16, %c0_15] : memref<64x512xf32, #tpu.memory_space<vmem>>, vector<8x256xf32>
    %c40 = arith.constant 40 : index
    %c256_16 = arith.constant 256 : index
    %18 = vector.load %arg14[%c40, %c256_16] : memref<64x512xf32, #tpu.memory_space<vmem>>, vector<8x256xf32>
    %19 = arith.addf %17, %18 : vector<8x256xf32>
    %20 = arith.addf %19, %6 : vector<8x256xf32>
    %c16_17 = arith.constant 16 : index
    %c0_18 = arith.constant 0 : index
    %21 = vector.load %arg14[%c16_17, %c0_18] : memref<64x512xf32, #tpu.memory_space<vmem>>, vector<8x256xf32>
    tpu.vector_store %arg14[%c16_17, %c0_18], %20 {strides = array<i32>} : memref<64x512xf32, #tpu.memory_space<vmem>>, vector<8x256xf32>,
    %c24 = arith.constant 24 : index
    %c0_19 = arith.constant 0 : index
    %22 = vector.load %arg14[%c24, %c0_19] : memref<64x512xf32, #tpu.memory_space<vmem>>, vector<8x256xf32>
    %c32 = arith.constant 32 : index
    %c256_20 = arith.constant 256 : index
    %23 = vector.load %arg14[%c32, %c256_20] : memref<64x512xf32, #tpu.memory_space<vmem>>, vector<8x256xf32>
    %24 = arith.addf %22, %23 : vector<8x256xf32>
    %25 = arith.addf %24, %6 : vector<8x256xf32>
    %c24_21 = arith.constant 24 : index
    %c0_22 = arith.constant 0 : index
    %26 = vector.load %arg14[%c24_21, %c0_22] : memref<64x512xf32, #tpu.memory_space<vmem>>, vector<8x256xf32>
    tpu.vector_store %arg14[%c24_21, %c0_22], %25 {strides = array<i32>} : memref<64x512xf32, #tpu.memory_space<vmem>>, vector<8x256xf32>,
    %c32_23 = arith.constant 32 : index
    %c0_24 = arith.constant 0 : index
    %27 = vector.load %arg14[%c32_23, %c0_24] : memref<64x512xf32, #tpu.memory_space<vmem>>, vector<8x256xf32>
    %c24_25 = arith.constant 24 : index
    %c256_26 = arith.constant 256 : index
    %28 = vector.load %arg14[%c24_25, %c256_26] : memref<64x512xf32, #tpu.memory_space<vmem>>, vector<8x256xf32>
    %29 = arith.addf %27, %28 : vector<8x256xf32>
    %30 = arith.addf %29, %6 : vector<8x256xf32>
    %c32_27 = arith.constant 32 : index
    %c0_28 = arith.constant 0 : index
    %31 = vector.load %arg14[%c32_27, %c0_28] : memref<64x512xf32, #tpu.memory_space<vmem>>, vector<8x256xf32>
    tpu.vector_store %arg14[%c32_27, %c0_28], %30 {strides = array<i32>} : memref<64x512xf32, #tpu.memory_space<vmem>>, vector<8x256xf32>,
    %c40_29 = arith.constant 40 : index
    %c0_30 = arith.constant 0 : index
    %32 = vector.load %arg14[%c40_29, %c0_30] : memref<64x512xf32, #tpu.memory_space<vmem>>, vector<8x256xf32>
    %c16_31 = arith.constant 16 : index
    %c256_32 = arith.constant 256 : index
    %33 = vector.load %arg14[%c16_31, %c256_32] : memref<64x512xf32, #tpu.memory_space<vmem>>, vector<8x256xf32>
    %34 = arith.addf %32, %33 : vector<8x256xf32>
    %35 = arith.addf %34, %6 : vector<8x256xf32>
    %c40_33 = arith.constant 40 : index
    %c0_34 = arith.constant 0 : index
    %36 = vector.load %arg14[%c40_33, %c0_34] : memref<64x512xf32, #tpu.memory_space<vmem>>, vector<8x256xf32>
    tpu.vector_store %arg14[%c40_33, %c0_34], %35 {strides = array<i32>} : memref<64x512xf32, #tpu.memory_space<vmem>>, vector<8x256xf32>,
    %c48_35 = arith.constant 48 : index
    %c0_36 = arith.constant 0 : index
    %37 = vector.load %arg14[%c48_35, %c0_36] : memref<64x512xf32, #tpu.memory_space<vmem>>, vector<8x256xf32>
    %c8_37 = arith.constant 8 : index
    %c256_38 = arith.constant 256 : index
    %38 = vector.load %arg14[%c8_37, %c256_38] : memref<64x512xf32, #tpu.memory_space<vmem>>, vector<8x256xf32>
    %39 = arith.addf %37, %38 : vector<8x256xf32>
    %40 = arith.addf %39, %6 : vector<8x256xf32>
    %c48_39 = arith.constant 48 : index
    %c0_40 = arith.constant 0 : index
    %41 = vector.load %arg14[%c48_39, %c0_40] : memref<64x512xf32, #tpu.memory_space<vmem>>, vector<8x256xf32>
    tpu.vector_store %arg14[%c48_39, %c0_40], %40 {strides = array<i32>} : memref<64x512xf32, #tpu.memory_space<vmem>>, vector<8x256xf32>,
    %c56_41 = arith.constant 56 : index
    %c0_42 = arith.constant 0 : index
    %42 = vector.load %arg14[%c56_41, %c0_42] : memref<64x512xf32, #tpu.memory_space<vmem>>, vector<8x256xf32>
    %c0_43 = arith.constant 0 : index
    %c256_44 = arith.constant 256 : index
    %43 = vector.load %arg14[%c0_43, %c256_44] : memref<64x512xf32, #tpu.memory_space<vmem>>, vector<8x256xf32>
    %44 = arith.addf %42, %43 : vector<8x256xf32>
    %45 = arith.addf %44, %6 : vector<8x256xf32>
    %c56_45 = arith.constant 56 : index
    %c0_46 = arith.constant 0 : index
    %46 = vector.load %arg14[%c56_45, %c0_46] : memref<64x512xf32, #tpu.memory_space<vmem>>, vector<8x256xf32>
    tpu.vector_store %arg14[%c56_45, %c0_46], %45 {strides = array<i32>} : memref<64x512xf32, #tpu.memory_space<vmem>>, vector<8x256xf32>,
    %47 = tpu.iota {dimensions = array<i32: 1>} : vector<8x256xi32>
    %c128_i32 = arith.constant 128 : i32
    %48 = vector.broadcast %c128_i32 : i32 to vector<8x256xi32>
    %49 = arith.cmpi sge, %47, %48 : vector<8x256xi32>
    %c192_i32 = arith.constant 192 : i32
    %50 = vector.broadcast %c192_i32 : i32 to vector<8x256xi32>
    %51 = arith.cmpi slt, %47, %50 : vector<8x256xi32>
    %52 = arith.andi %49, %51 : vector<8x256xi1>
    %53 = tpu.iota {dimensions = array<i32: 1>} : vector<8x128xi32>
    %c64_i32 = arith.constant 64 : i32
    %54 = vector.broadcast %c64_i32 : i32 to vector<8x128xi32>
    %55 = arith.cmpi slt, %53, %54 : vector<8x128xi32>
    %c0_47 = arith.constant 0 : index
    %c0_48 = arith.constant 0 : index
    %56 = vector.load %arg2[%c0_47, %c0_48] : memref<128x256xbf16, #tpu.memory_space<vmem>>, vector<128x256xbf16>
    %cst_49 = arith.constant 0.000000e+00 : f32
    %57 = vector.broadcast %cst_49 : f32 to vector<8x128xf32>
    %cst_50 = arith.constant 0.000000e+00 : f32
    %58 = vector.broadcast %cst_50 : f32 to vector<8x128xf32>
    %c0_51 = arith.constant 0 : index
    %c0_52 = arith.constant 0 : index
    %59 = vector.load %arg14[%c0_51, %c0_52] : memref<64x512xf32, #tpu.memory_space<vmem>>, vector<8x256xf32>
    %60 = arith.truncf %57 : vector<8x128xf32> to vector<8x128xbf16>
    %cst_53 = arith.constant dense<0.000000e+00> : vector<8x256xf32>
    %61 = tpu.matmul %60, %56, %cst_53 {dimension_numbers = #tpu.dot_dimension_numbers<[1], [0], [0], [1], [0, 0, 1, 1], [], []>} : vector<8x128xbf16>, vector<128x256xbf16>, vector<8x256xf32> -> vector<8x256xf32>
    %62 = arith.addf %59, %61 : vector<8x256xf32>
    %63 = math.tanh %62 : vector<8x256xf32>
    %64 = arith.negf %62 : vector<8x256xf32>
    %65 = math.exp %64 : vector<8x256xf32>
    %cst_54 = arith.constant 1.000000e+00 : f32
    %66 = vector.broadcast %cst_54 : f32 to vector<8x256xf32>
    %67 = arith.addf %66, %65 : vector<8x256xf32>
    %68 = arith.divf %66, %67 : vector<8x256xf32>
    %69 = arith.select %52, %63, %68 : vector<8x256xi1>, vector<8x256xf32>
    %70 = vector.extract_strided_slice %69 {offsets = [0, 0], sizes = [8, 128], strides = [1, 1]} : vector<8x256xf32> to vector<8x128xf32>
    %71 = vector.extract_strided_slice %69 {offsets = [0, 128], sizes = [8, 128], strides = [1, 1]} : vector<8x256xf32> to vector<8x128xf32>
    %72 = arith.mulf %70, %71 : vector<8x128xf32>
    %73 = arith.mulf %70, %58 : vector<8x128xf32>
    %c64_i32_55 = arith.constant 64 : i32
    %74 = tpu.dynamic_rotate %73 by %c64_i32_55 dim 1 : vector<8x128xf32>, i32 -> vector<8x128xf32>
    %75 = arith.addf %72, %74 : vector<8x128xf32>
    %c64_i32_56 = arith.constant 64 : i32
    %76 = tpu.dynamic_rotate %75 by %c64_i32_56 dim 1 : vector<8x128xf32>, i32 -> vector<8x128xf32>
    %77 = arith.select %55, %75, %76 : vector<8x128xi1>, vector<8x128xf32>
    %c64_i32_57 = arith.constant 64 : i32
    %78 = tpu.dynamic_rotate %71 by %c64_i32_57 dim 1 : vector<8x128xf32>, i32 -> vector<8x128xf32>
    %79 = arith.select %55, %78, %71 : vector<8x128xi1>, vector<8x128xf32>
    %80 = math.tanh %77 : vector<8x128xf32>
    %81 = arith.mulf %79, %80 : vector<8x128xf32>
    %c8_58 = arith.constant 8 : index
    %c0_59 = arith.constant 0 : index
    %82 = vector.load %arg14[%c8_58, %c0_59] : memref<64x512xf32, #tpu.memory_space<vmem>>, vector<8x256xf32>
    %83 = arith.truncf %81 : vector<8x128xf32> to vector<8x128xbf16>
    %cst_60 = arith.constant dense<0.000000e+00> : vector<8x256xf32>
    %84 = tpu.matmul %83, %56, %cst_60 {dimension_numbers = #tpu.dot_dimension_numbers<[1], [0], [0], [1], [0, 0, 1, 1], [], []>} : vector<8x128xbf16>, vector<128x256xbf16>, vector<8x256xf32> -> vector<8x256xf32>
    %85 = arith.addf %82, %84 : vector<8x256xf32>
    %86 = math.tanh %85 : vector<8x256xf32>
    %87 = arith.negf %85 : vector<8x256xf32>
    %88 = math.exp %87 : vector<8x256xf32>
    %cst_61 = arith.constant 1.000000e+00 : f32
    %89 = vector.broadcast %cst_61 : f32 to vector<8x256xf32>
    %90 = arith.addf %89, %88 : vector<8x256xf32>
    %91 = arith.divf %89, %90 : vector<8x256xf32>
    %92 = arith.select %52, %86, %91 : vector<8x256xi1>, vector<8x256xf32>
    %93 = vector.extract_strided_slice %92 {offsets = [0, 0], sizes = [8, 128], strides = [1, 1]} : vector<8x256xf32> to vector<8x128xf32>
    %94 = vector.extract_strided_slice %92 {offsets = [0, 128], sizes = [8, 128], strides = [1, 1]} : vector<8x256xf32> to vector<8x128xf32>
    %95 = arith.mulf %93, %94 : vector<8x128xf32>
    %96 = arith.mulf %93, %77 : vector<8x128xf32>
    %c64_i32_62 = arith.constant 64 : i32
    %97 = tpu.dynamic_rotate %96 by %c64_i32_62 dim 1 : vector<8x128xf32>, i32 -> vector<8x128xf32>
    %98 = arith.addf %95, %97 : vector<8x128xf32>
    %c64_i32_63 = arith.constant 64 : i32
    %99 = tpu.dynamic_rotate %98 by %c64_i32_63 dim 1 : vector<8x128xf32>, i32 -> vector<8x128xf32>
    %100 = arith.select %55, %98, %99 : vector<8x128xi1>, vector<8x128xf32>
    %c64_i32_64 = arith.constant 64 : i32
    %101 = tpu.dynamic_rotate %94 by %c64_i32_64 dim 1 : vector<8x128xf32>, i32 -> vector<8x128xf32>
    %102 = arith.select %55, %101, %94 : vector<8x128xi1>, vector<8x128xf32>
    %103 = math.tanh %100 : vector<8x128xf32>
    %104 = arith.mulf %102, %103 : vector<8x128xf32>
    %c16_65 = arith.constant 16 : index
    %c0_66 = arith.constant 0 : index
    %105 = vector.load %arg14[%c16_65, %c0_66] : memref<64x512xf32, #tpu.memory_space<vmem>>, vector<8x256xf32>
    %106 = arith.truncf %104 : vector<8x128xf32> to vector<8x128xbf16>
    %cst_67 = arith.constant dense<0.000000e+00> : vector<8x256xf32>
    %107 = tpu.matmul %106, %56, %cst_67 {dimension_numbers = #tpu.dot_dimension_numbers<[1], [0], [0], [1], [0, 0, 1, 1], [], []>} : vector<8x128xbf16>, vector<128x256xbf16>, vector<8x256xf32> -> vector<8x256xf32>
    %108 = arith.addf %105, %107 : vector<8x256xf32>
    %109 = math.tanh %108 : vector<8x256xf32>
    %110 = arith.negf %108 : vector<8x256xf32>
    %111 = math.exp %110 : vector<8x256xf32>
    %cst_68 = arith.constant 1.000000e+00 : f32
    %112 = vector.broadcast %cst_68 : f32 to vector<8x256xf32>
    %113 = arith.addf %112, %111 : vector<8x256xf32>
    %114 = arith.divf %112, %113 : vector<8x256xf32>
    %115 = arith.select %52, %109, %114 : vector<8x256xi1>, vector<8x256xf32>
    %116 = vector.extract_strided_slice %115 {offsets = [0, 0], sizes = [8, 128], strides = [1, 1]} : vector<8x256xf32> to vector<8x128xf32>
    %117 = vector.extract_strided_slice %115 {offsets = [0, 128], sizes = [8, 128], strides = [1, 1]} : vector<8x256xf32> to vector<8x128xf32>
    %118 = arith.mulf %116, %117 : vector<8x128xf32>
    %119 = arith.mulf %116, %100 : vector<8x128xf32>
    %c64_i32_69 = arith.constant 64 : i32
    %120 = tpu.dynamic_rotate %119 by %c64_i32_69 dim 1 : vector<8x128xf32>, i32 -> vector<8x128xf32>
    %121 = arith.addf %118, %120 : vector<8x128xf32>
    %c64_i32_70 = arith.constant 64 : i32
    %122 = tpu.dynamic_rotate %121 by %c64_i32_70 dim 1 : vector<8x128xf32>, i32 -> vector<8x128xf32>
    %123 = arith.select %55, %121, %122 : vector<8x128xi1>, vector<8x128xf32>
    %c64_i32_71 = arith.constant 64 : i32
    %124 = tpu.dynamic_rotate %117 by %c64_i32_71 dim 1 : vector<8x128xf32>, i32 -> vector<8x128xf32>
    %125 = arith.select %55, %124, %117 : vector<8x128xi1>, vector<8x128xf32>
    %126 = math.tanh %123 : vector<8x128xf32>
    %127 = arith.mulf %125, %126 : vector<8x128xf32>
    %c24_72 = arith.constant 24 : index
    %c0_73 = arith.constant 0 : index
    %128 = vector.load %arg14[%c24_72, %c0_73] : memref<64x512xf32, #tpu.memory_space<vmem>>, vector<8x256xf32>
    %129 = arith.truncf %127 : vector<8x128xf32> to vector<8x128xbf16>
    %cst_74 = arith.constant dense<0.000000e+00> : vector<8x256xf32>
    %130 = tpu.matmul %129, %56, %cst_74 {dimension_numbers = #tpu.dot_dimension_numbers<[1], [0], [0], [1], [0, 0, 1, 1], [], []>} : vector<8x128xbf16>, vector<128x256xbf16>, vector<8x256xf32> -> vector<8x256xf32>
    %131 = arith.addf %128, %130 : vector<8x256xf32>
    %132 = math.tanh %131 : vector<8x256xf32>
    %133 = arith.negf %131 : vector<8x256xf32>
    %134 = math.exp %133 : vector<8x256xf32>
    %cst_75 = arith.constant 1.000000e+00 : f32
    %135 = vector.broadcast %cst_75 : f32 to vector<8x256xf32>
    %136 = arith.addf %135, %134 : vector<8x256xf32>
    %137 = arith.divf %135, %136 : vector<8x256xf32>
    %138 = arith.select %52, %132, %137 : vector<8x256xi1>, vector<8x256xf32>
    %139 = vector.extract_strided_slice %138 {offsets = [0, 0], sizes = [8, 128], strides = [1, 1]} : vector<8x256xf32> to vector<8x128xf32>
    %140 = vector.extract_strided_slice %138 {offsets = [0, 128], sizes = [8, 128], strides = [1, 1]} : vector<8x256xf32> to vector<8x128xf32>
    %141 = arith.mulf %139, %140 : vector<8x128xf32>
    %142 = arith.mulf %139, %123 : vector<8x128xf32>
    %c64_i32_76 = arith.constant 64 : i32
    %143 = tpu.dynamic_rotate %142 by %c64_i32_76 dim 1 : vector<8x128xf32>, i32 -> vector<8x128xf32>
    %144 = arith.addf %141, %143 : vector<8x128xf32>
    %c64_i32_77 = arith.constant 64 : i32
    %145 = tpu.dynamic_rotate %144 by %c64_i32_77 dim 1 : vector<8x128xf32>, i32 -> vector<8x128xf32>
    %146 = arith.select %55, %144, %145 : vector<8x128xi1>, vector<8x128xf32>
    %c64_i32_78 = arith.constant 64 : i32
    %147 = tpu.dynamic_rotate %140 by %c64_i32_78 dim 1 : vector<8x128xf32>, i32 -> vector<8x128xf32>
    %148 = arith.select %55, %147, %140 : vector<8x128xi1>, vector<8x128xf32>
    %149 = math.tanh %146 : vector<8x128xf32>
    %150 = arith.mulf %148, %149 : vector<8x128xf32>
    %c32_79 = arith.constant 32 : index
    %c0_80 = arith.constant 0 : index
    %151 = vector.load %arg14[%c32_79, %c0_80] : memref<64x512xf32, #tpu.memory_space<vmem>>, vector<8x256xf32>
    %152 = arith.truncf %150 : vector<8x128xf32> to vector<8x128xbf16>
    %cst_81 = arith.constant dense<0.000000e+00> : vector<8x256xf32>
    %153 = tpu.matmul %152, %56, %cst_81 {dimension_numbers = #tpu.dot_dimension_numbers<[1], [0], [0], [1], [0, 0, 1, 1], [], []>} : vector<8x128xbf16>, vector<128x256xbf16>, vector<8x256xf32> -> vector<8x256xf32>
    %154 = arith.addf %151, %153 : vector<8x256xf32>
    %155 = math.tanh %154 : vector<8x256xf32>
    %156 = arith.negf %154 : vector<8x256xf32>
    %157 = math.exp %156 : vector<8x256xf32>
    %cst_82 = arith.constant 1.000000e+00 : f32
    %158 = vector.broadcast %cst_82 : f32 to vector<8x256xf32>
    %159 = arith.addf %158, %157 : vector<8x256xf32>
    %160 = arith.divf %158, %159 : vector<8x256xf32>
    %161 = arith.select %52, %155, %160 : vector<8x256xi1>, vector<8x256xf32>
    %162 = vector.extract_strided_slice %161 {offsets = [0, 0], sizes = [8, 128], strides = [1, 1]} : vector<8x256xf32> to vector<8x128xf32>
    %163 = vector.extract_strided_slice %161 {offsets = [0, 128], sizes = [8, 128], strides = [1, 1]} : vector<8x256xf32> to vector<8x128xf32>
    %164 = arith.mulf %162, %163 : vector<8x128xf32>
    %165 = arith.mulf %162, %146 : vector<8x128xf32>
    %c64_i32_83 = arith.constant 64 : i32
    %166 = tpu.dynamic_rotate %165 by %c64_i32_83 dim 1 : vector<8x128xf32>, i32 -> vector<8x128xf32>
    %167 = arith.addf %164, %166 : vector<8x128xf32>
    %c64_i32_84 = arith.constant 64 : i32
    %168 = tpu.dynamic_rotate %167 by %c64_i32_84 dim 1 : vector<8x128xf32>, i32 -> vector<8x128xf32>
    %169 = arith.select %55, %167, %168 : vector<8x128xi1>, vector<8x128xf32>
    %c64_i32_85 = arith.constant 64 : i32
    %170 = tpu.dynamic_rotate %163 by %c64_i32_85 dim 1 : vector<8x128xf32>, i32 -> vector<8x128xf32>
    %171 = arith.select %55, %170, %163 : vector<8x128xi1>, vector<8x128xf32>
    %172 = math.tanh %169 : vector<8x128xf32>
    %173 = arith.mulf %171, %172 : vector<8x128xf32>
    %c40_86 = arith.constant 40 : index
    %c0_87 = arith.constant 0 : index
    %174 = vector.load %arg14[%c40_86, %c0_87] : memref<64x512xf32, #tpu.memory_space<vmem>>, vector<8x256xf32>
    %175 = arith.truncf %173 : vector<8x128xf32> to vector<8x128xbf16>
    %cst_88 = arith.constant dense<0.000000e+00> : vector<8x256xf32>
    %176 = tpu.matmul %175, %56, %cst_88 {dimension_numbers = #tpu.dot_dimension_numbers<[1], [0], [0], [1], [0, 0, 1, 1], [], []>} : vector<8x128xbf16>, vector<128x256xbf16>, vector<8x256xf32> -> vector<8x256xf32>
    %177 = arith.addf %174, %176 : vector<8x256xf32>
    %178 = math.tanh %177 : vector<8x256xf32>
    %179 = arith.negf %177 : vector<8x256xf32>
    %180 = math.exp %179 : vector<8x256xf32>
    %cst_89 = arith.constant 1.000000e+00 : f32
    %181 = vector.broadcast %cst_89 : f32 to vector<8x256xf32>
    %182 = arith.addf %181, %180 : vector<8x256xf32>
    %183 = arith.divf %181, %182 : vector<8x256xf32>
    %184 = arith.select %52, %178, %183 : vector<8x256xi1>, vector<8x256xf32>
    %185 = vector.extract_strided_slice %184 {offsets = [0, 0], sizes = [8, 128], strides = [1, 1]} : vector<8x256xf32> to vector<8x128xf32>
    %186 = vector.extract_strided_slice %184 {offsets = [0, 128], sizes = [8, 128], strides = [1, 1]} : vector<8x256xf32> to vector<8x128xf32>
    %187 = arith.mulf %185, %186 : vector<8x128xf32>
    %188 = arith.mulf %185, %169 : vector<8x128xf32>
    %c64_i32_90 = arith.constant 64 : i32
    %189 = tpu.dynamic_rotate %188 by %c64_i32_90 dim 1 : vector<8x128xf32>, i32 -> vector<8x128xf32>
    %190 = arith.addf %187, %189 : vector<8x128xf32>
    %c64_i32_91 = arith.constant 64 : i32
    %191 = tpu.dynamic_rotate %190 by %c64_i32_91 dim 1 : vector<8x128xf32>, i32 -> vector<8x128xf32>
    %192 = arith.select %55, %190, %191 : vector<8x128xi1>, vector<8x128xf32>
    %c64_i32_92 = arith.constant 64 : i32
    %193 = tpu.dynamic_rotate %186 by %c64_i32_92 dim 1 : vector<8x128xf32>, i32 -> vector<8x128xf32>
    %194 = arith.select %55, %193, %186 : vector<8x128xi1>, vector<8x128xf32>
    %195 = math.tanh %192 : vector<8x128xf32>
    %196 = arith.mulf %194, %195 : vector<8x128xf32>
    %c48_93 = arith.constant 48 : index
    %c0_94 = arith.constant 0 : index
    %197 = vector.load %arg14[%c48_93, %c0_94] : memref<64x512xf32, #tpu.memory_space<vmem>>, vector<8x256xf32>
    %198 = arith.truncf %196 : vector<8x128xf32> to vector<8x128xbf16>
    %cst_95 = arith.constant dense<0.000000e+00> : vector<8x256xf32>
    %199 = tpu.matmul %198, %56, %cst_95 {dimension_numbers = #tpu.dot_dimension_numbers<[1], [0], [0], [1], [0, 0, 1, 1], [], []>} : vector<8x128xbf16>, vector<128x256xbf16>, vector<8x256xf32> -> vector<8x256xf32>
    %200 = arith.addf %197, %199 : vector<8x256xf32>
    %201 = math.tanh %200 : vector<8x256xf32>
    %202 = arith.negf %200 : vector<8x256xf32>
    %203 = math.exp %202 : vector<8x256xf32>
    %cst_96 = arith.constant 1.000000e+00 : f32
    %204 = vector.broadcast %cst_96 : f32 to vector<8x256xf32>
    %205 = arith.addf %204, %203 : vector<8x256xf32>
    %206 = arith.divf %204, %205 : vector<8x256xf32>
    %207 = arith.select %52, %201, %206 : vector<8x256xi1>, vector<8x256xf32>
    %208 = vector.extract_strided_slice %207 {offsets = [0, 0], sizes = [8, 128], strides = [1, 1]} : vector<8x256xf32> to vector<8x128xf32>
    %209 = vector.extract_strided_slice %207 {offsets = [0, 128], sizes = [8, 128], strides = [1, 1]} : vector<8x256xf32> to vector<8x128xf32>
    %210 = arith.mulf %208, %209 : vector<8x128xf32>
    %211 = arith.mulf %208, %192 : vector<8x128xf32>
    %c64_i32_97 = arith.constant 64 : i32
    %212 = tpu.dynamic_rotate %211 by %c64_i32_97 dim 1 : vector<8x128xf32>, i32 -> vector<8x128xf32>
    %213 = arith.addf %210, %212 : vector<8x128xf32>
    %c64_i32_98 = arith.constant 64 : i32
    %214 = tpu.dynamic_rotate %213 by %c64_i32_98 dim 1 : vector<8x128xf32>, i32 -> vector<8x128xf32>
    %215 = arith.select %55, %213, %214 : vector<8x128xi1>, vector<8x128xf32>
    %c64_i32_99 = arith.constant 64 : i32
    %216 = tpu.dynamic_rotate %209 by %c64_i32_99 dim 1 : vector<8x128xf32>, i32 -> vector<8x128xf32>
    %217 = arith.select %55, %216, %209 : vector<8x128xi1>, vector<8x128xf32>
    %218 = math.tanh %215 : vector<8x128xf32>
    %219 = arith.mulf %217, %218 : vector<8x128xf32>
    %c56_100 = arith.constant 56 : index
    %c0_101 = arith.constant 0 : index
    %220 = vector.load %arg14[%c56_100, %c0_101] : memref<64x512xf32, #tpu.memory_space<vmem>>, vector<8x256xf32>
    %221 = arith.truncf %219 : vector<8x128xf32> to vector<8x128xbf16>
    %cst_102 = arith.constant dense<0.000000e+00> : vector<8x256xf32>
    %222 = tpu.matmul %221, %56, %cst_102 {dimension_numbers = #tpu.dot_dimension_numbers<[1], [0], [0], [1], [0, 0, 1, 1], [], []>} : vector<8x128xbf16>, vector<128x256xbf16>, vector<8x256xf32> -> vector<8x256xf32>
    %223 = arith.addf %220, %222 : vector<8x256xf32>
    %224 = math.tanh %223 : vector<8x256xf32>
    %225 = arith.negf %223 : vector<8x256xf32>
    %226 = math.exp %225 : vector<8x256xf32>
    %cst_103 = arith.constant 1.000000e+00 : f32
    %227 = vector.broadcast %cst_103 : f32 to vector<8x256xf32>
    %228 = arith.addf %227, %226 : vector<8x256xf32>
    %229 = arith.divf %227, %228 : vector<8x256xf32>
    %230 = arith.select %52, %224, %229 : vector<8x256xi1>, vector<8x256xf32>
    %231 = vector.extract_strided_slice %230 {offsets = [0, 0], sizes = [8, 128], strides = [1, 1]} : vector<8x256xf32> to vector<8x128xf32>
    %232 = vector.extract_strided_slice %230 {offsets = [0, 128], sizes = [8, 128], strides = [1, 1]} : vector<8x256xf32> to vector<8x128xf32>
    %233 = arith.mulf %231, %232 : vector<8x128xf32>
    %234 = arith.mulf %231, %215 : vector<8x128xf32>
    %c64_i32_104 = arith.constant 64 : i32
    %235 = tpu.dynamic_rotate %234 by %c64_i32_104 dim 1 : vector<8x128xf32>, i32 -> vector<8x128xf32>
    %236 = arith.addf %233, %235 : vector<8x128xf32>
    %c64_i32_105 = arith.constant 64 : i32
    %237 = tpu.dynamic_rotate %236 by %c64_i32_105 dim 1 : vector<8x128xf32>, i32 -> vector<8x128xf32>
    %238 = arith.select %55, %236, %237 : vector<8x128xi1>, vector<8x128xf32>
    %c64_i32_106 = arith.constant 64 : i32
    %239 = tpu.dynamic_rotate %232 by %c64_i32_106 dim 1 : vector<8x128xf32>, i32 -> vector<8x128xf32>
    %240 = arith.select %55, %239, %232 : vector<8x128xi1>, vector<8x128xf32>
    %241 = math.tanh %238 : vector<8x128xf32>
    %242 = arith.mulf %240, %241 : vector<8x128xf32>
    %243 = tpu.concatenate %81, %104, %127, %150, %173, %196, %219, %242 in 0 : vector<8x128xf32>, vector<8x128xf32>, vector<8x128xf32>, vector<8x128xf32>, vector<8x128xf32>, vector<8x128xf32>, vector<8x128xf32>, vector<8x128xf32> -> vector<64x128xf32>
    %244 = arith.truncf %243 : vector<64x128xf32> to vector<64x128xbf16>
    %c0_107 = arith.constant 0 : index
    %c0_108 = arith.constant 0 : index
    %245 = vector.load %arg4[%c0_107, %c0_108] : memref<32x64xbf16, #tpu.memory_space<vmem>>, vector<32x64xbf16>
    %cst_109 = arith.constant dense<0.000000e+00> : vector<32x128xf32>
    %246 = tpu.matmul %245, %244, %cst_109 {dimension_numbers = #tpu.dot_dimension_numbers<[1], [0], [0], [1], [0, 0, 1, 1], [], []>} : vector<32x64xbf16>, vector<64x128xbf16>, vector<32x128xf32> -> vector<32x128xf32>
    %247 = tpu.iota {dimensions = array<i32: 1>} : vector<16x128xi32>
    %c32_i32 = arith.constant 32 : i32
    %248 = vector.broadcast %c32_i32 : i32 to vector<16x128xi32>
    %249 = arith.cmpi slt, %247, %248 : vector<16x128xi32>
    %250 = vector.extract_strided_slice %246 {offsets = [0, 0], sizes = [16, 128], strides = [1, 1]} : vector<32x128xf32> to vector<16x128xf32>
    %251 = vector.extract_strided_slice %246 {offsets = [16, 0], sizes = [16, 128], strides = [1, 1]} : vector<32x128xf32> to vector<16x128xf32>
    %252 = arith.select %249, %250, %251 : vector<16x128xi1>, vector<16x128xf32>
    %253 = arith.truncf %252 : vector<16x128xf32> to vector<16x128xbf16>
    %c0_110 = arith.constant 0 : index
    %c0_111 = arith.constant 0 : index
    %254 = vector.load %arg5[%c0_110, %c0_111] : memref<128x16xbf16, #tpu.memory_space<vmem>>, vector<128x16xbf16>
    %cst_112 = arith.constant dense<0.000000e+00> : vector<16x16xf32>
    %255 = tpu.matmul %253, %254, %cst_112 {dimension_numbers = #tpu.dot_dimension_numbers<[1], [0], [0], [1], [0, 0, 1, 1], [], []>} : vector<16x128xbf16>, vector<128x16xbf16>, vector<16x16xf32> -> vector<16x16xf32>
    %256 = math.tanh %255 : vector<16x16xf32>
    %c0_113 = arith.constant 0 : index
    %c0_114 = arith.constant 0 : index
    %257 = vector.load %arg6[%c0_113, %c0_114] : memref<16x8xf32, #tpu.memory_space<vmem>>, vector<16x8xf32>
    %cst_115 = arith.constant dense<0.000000e+00> : vector<16x8xf32>
    %258 = tpu.matmul %256, %257, %cst_115 {dimension_numbers = #tpu.dot_dimension_numbers<[1], [0], [0], [1], [0, 0, 1, 1], [], []>} : vector<16x16xf32>, vector<16x8xf32>, vector<16x8xf32> -> vector<16x8xf32>
    %c0_116 = arith.constant 0 : index
    %c0_117 = arith.constant 0 : index
    %259 = vector.load %arg8[%c0_116, %c0_117] : memref<2x16xf32, #tpu.memory_space<vmem>>, vector<2x16xf32>
    %c0_118 = arith.constant 0 : index
    %c0_119 = arith.constant 0 : index
    %260 = vector.load %arg7[%c0_118, %c0_119] : memref<16x8xf32, #tpu.memory_space<vmem>>, vector<16x8xf32>
    %261 = arith.mulf %258, %260 : vector<16x8xf32>
    %cst_120 = arith.constant dense<0.000000e+00> : vector<2x8xf32>
    %262 = tpu.matmul %259, %261, %cst_120 {dimension_numbers = #tpu.dot_dimension_numbers<[1], [0], [0], [1], [0, 0, 1, 1], [], []>} : vector<2x16xf32>, vector<16x8xf32>, vector<2x8xf32> -> vector<2x8xf32>
    %cst_121 = arith.constant dense<0xFF800000> : vector<2xf32>
    %263 = vector.multi_reduction <maximumf>, %262, %cst_121 [1] : vector<2x8xf32> to vector<2xf32>
    %264 = vector.shape_cast %263 : vector<2xf32> to vector<2x1xf32>
    %265 = vector.broadcast %264 : vector<2x1xf32> to vector<2x8xf32>
    %266 = arith.subf %262, %265 : vector<2x8xf32>
    %267 = math.exp %266 : vector<2x8xf32>
    %cst_122 = arith.constant dense<0.000000e+00> : vector<2xf32>
    %268 = vector.multi_reduction <add>, %267, %cst_122 [1] : vector<2x8xf32> to vector<2xf32>
    %269 = vector.shape_cast %268 : vector<2xf32> to vector<2x1xf32>
    %270 = tpu.reciprocal %269 : vector<2x1xf32> -> vector<2x1xf32>
    %271 = vector.broadcast %270 : vector<2x1xf32> to vector<2x8xf32>
    %272 = arith.mulf %267, %271 : vector<2x8xf32>
    %c0_123 = arith.constant 0 : index
    %c0_124 = arith.constant 0 : index
    %273 = vector.load %arg9[%c0_123, %c0_124] : memref<8x16xf32, #tpu.memory_space<vmem>>, vector<8x16xf32>
    %cst_125 = arith.constant dense<0.000000e+00> : vector<2x16xf32>
    %274 = tpu.matmul %272, %273, %cst_125 {dimension_numbers = #tpu.dot_dimension_numbers<[1], [0], [0], [1], [0, 0, 1, 1], [], []>} : vector<2x8xf32>, vector<8x16xf32>, vector<2x16xf32> -> vector<2x16xf32>
    %c0_126 = arith.constant 0 : index
    %c0_127 = arith.constant 0 : index
    %275 = vector.load %arg10[%c0_126, %c0_127] : memref<2x16xf32, #tpu.memory_space<vmem>>, vector<2x16xf32>
    %276 = arith.mulf %274, %275 : vector<2x16xf32>
    %277 = arith.truncf %276 : vector<2x16xf32> to vector<2x16xbf16>
    %cst_128 = arith.constant dense<0.000000e+00> : vector<2x128xf32>
    %278 = tpu.matmul %277, %253, %cst_128 {dimension_numbers = #tpu.dot_dimension_numbers<[1], [0], [0], [1], [0, 0, 1, 1], [], []>} : vector<2x16xbf16>, vector<16x128xbf16>, vector<2x128xf32> -> vector<2x128xf32>
    %279 = arith.truncf %278 : vector<2x128xf32> to vector<2x128xbf16>
    %c0_129 = arith.constant 0 : index
    %c0_130 = arith.constant 0 : index
    %280 = vector.load %arg11[%c0_129, %c0_130] : memref<128x4xbf16, #tpu.memory_space<vmem>>, vector<128x4xbf16>
    %cst_131 = arith.constant dense<0.000000e+00> : vector<2x4xf32>
    %281 = tpu.matmul %279, %280, %cst_131 {dimension_numbers = #tpu.dot_dimension_numbers<[1], [0], [0], [1], [0, 0, 1, 1], [], []>} : vector<2x128xbf16>, vector<128x4xbf16>, vector<2x4xf32> -> vector<2x4xf32>
    %c0_132 = arith.constant 0 : index
    %c0_133 = arith.constant 0 : index
    %282 = vector.load %arg12[%c0_132, %c0_133] : memref<1x4xf32, #tpu.memory_space<vmem>>, vector<1x4xf32>
    %283 = vector.broadcast %282 : vector<1x4xf32> to vector<2x4xf32>
    %284 = arith.addf %281, %283 : vector<2x4xf32>
    %c0_134 = arith.constant 0 : index
    %c0_135 = arith.constant 0 : index
    %285 = vector.load %arg13[%c0_134, %c0_135] : memref<2x4xf32, #tpu.memory_space<vmem>>, vector<2x4xf32>
    tpu.vector_store %arg13[%c0_134, %c0_135], %284 {strides = array<i32>} : memref<2x4xf32, #tpu.memory_space<vmem>>, vector<2x4xf32>,
    return
  }
}

</mosaic_0001>

<llo_original>
// kernel: bilstm_attn_forward.1
$region0: #{bilstm_attn_forward.1}
  #allocation0 [shape = 'u32[]', space=smem, size = 0x4, offset = 0x4, fixed_abs, tag = 'smem constant byte address 0x4 - core index']
  #allocation1 [shape = 'u32[144,128]{1,0:T(1,128)}', space=vmem, size = 0x12000, scoped, tag = 'internal scratch']
  #allocation2 [shape = 'f32[64,512]{1,0:T(8,128)}', space=vmem, size = 0x20000, scoped, tag = 'scratch operand']
  %s0 = inlined_call_operand.vmem [shape: bf16[64,32], index: 0, kind: input, shape index: {}]
  %s1 = inlined_call_operand.vmem [shape: bf16[32,512], index: 1, kind: input, shape index: {}]
  %s2 = inlined_call_operand.vmem [shape: bf16[128,256], index: 2, kind: input, shape index: {}]
  %s3 = inlined_call_operand.vmem [shape: f32[1,256], index: 3, kind: input, shape index: {}]
  %s4 = inlined_call_operand.vmem [shape: bf16[32,64], index: 4, kind: input, shape index: {}]
  %s5 = inlined_call_operand.vmem [shape: bf16[128,16], index: 5, kind: input, shape index: {}]
  %s6 = inlined_call_operand.vmem [shape: f32[16,8], index: 6, kind: input, shape index: {}]
  %s7 = inlined_call_operand.vmem [shape: f32[16,8], index: 7, kind: input, shape index: {}]
  %s8 = inlined_call_operand.vmem [shape: f32[2,16], index: 8, kind: input, shape index: {}]
  %s9 = inlined_call_operand.vmem [shape: f32[8,16], index: 9, kind: input, shape index: {}]
  %s10 = inlined_call_operand.vmem [shape: f32[2,16], index: 10, kind: input, shape index: {}]
  %s11 = inlined_call_operand.vmem [shape: bf16[128,4], index: 11, kind: input, shape index: {}]
  %s12 = inlined_call_operand.vmem [shape: f32[1,4], index: 12, kind: input, shape index: {}]
  %s13 = inlined_call_operand.hbm [shape: f32[2,4], index: 13, kind: output, shape index: {}]
  %s14 = sld [smem:[#allocation0]]
  $region62: #{bilstm_attn_forward.1} parent=0
    _
  %s16 = ssub.s32 1, %s14
  %s17 = scalar_select 0, %s16, %s14
  $region1: #{bilstm_attn_forward.1} parent=0
    #allocation3 [shape = 'u8[1024]{0}', space=vmem, size = 0x400, scoped, tag = 'output window, operand 0, single buffered']
    #allocation4 [shape = 's32[1]{0}', space=sflag, size = 0x4, scoped, tag = 'scoped memory for bilstm_attn_forward.1']
    %18 = vsyncpa [#allocation4], 0
    // Predicated region
    $region2: #{bilstm_attn_forward.1} parent=1 // pred_check
      _
    $region3: #{bilstm_attn_forward.1} parent=1 // pred_check_branch
      %20 = sbr.rel (0) target = $region5
    $region4: #{bilstm_attn_forward.1} parent=1 // pred_region
      _
    $region5: #{bilstm_attn_forward.1} parent=1 // pred_fallthru
      _
    // Predicated region
    $region6: #{bilstm_attn_forward.1} parent=1 // pred_check
      _
    $region7: #{bilstm_attn_forward.1} parent=1 // pred_check_branch
      %22 = sbr.rel (0) target = $region9
    $region8: #{bilstm_attn_forward.1} parent=1 // pred_region
      _
    $region9: #{bilstm_attn_forward.1} parent=1 // pred_fallthru
      _
    // Predicated region
    $region10: #{bilstm_attn_forward.1} parent=1 // pred_check
      _
    $region11: #{bilstm_attn_forward.1} parent=1 // pred_check_branch
      %24 = sbr.rel (0) target = $region13
    $region12: #{bilstm_attn_forward.1} parent=1 // pred_region
      _
    $region13: #{bilstm_attn_forward.1} parent=1 // pred_fallthru
      _
    // Predicated region
    $region14: #{bilstm_attn_forward.1} parent=1 // pred_check
      _
    $region15: #{bilstm_attn_forward.1} parent=1 // pred_check_branch
      %26 = sbr.rel (0) target = $region17
    $region16: #{bilstm_attn_forward.1} parent=1 // pred_region
      _
    $region17: #{bilstm_attn_forward.1} parent=1 // pred_fallthru
      _
    // Predicated region
    $region18: #{bilstm_attn_forward.1} parent=1 // pred_check
      _
    $region19: #{bilstm_attn_forward.1} parent=1 // pred_check_branch
      %28 = sbr.rel (0) target = $region21
    $region20: #{bilstm_attn_forward.1} parent=1 // pred_region
      _
    $region21: #{bilstm_attn_forward.1} parent=1 // pred_fallthru
      _
    // Predicated region
    $region22: #{bilstm_attn_forward.1} parent=1 // pred_check
      _
    $region23: #{bilstm_attn_forward.1} parent=1 // pred_check_branch
      %30 = sbr.rel (0) target = $region25
    $region24: #{bilstm_attn_forward.1} parent=1 // pred_region
      _
    $region25: #{bilstm_attn_forward.1} parent=1 // pred_fallthru
      _
    // Predicated region
    $region26: #{bilstm_attn_forward.1} parent=1 // pred_check
      _
    $region27: #{bilstm_attn_forward.1} parent=1 // pred_check_branch
      %32 = sbr.rel (0) target = $region29
    $region28: #{bilstm_attn_forward.1} parent=1 // pred_region
      _
    $region29: #{bilstm_attn_forward.1} parent=1 // pred_fallthru
      _
    // Predicated region
    $region30: #{bilstm_attn_forward.1} parent=1 // pred_check
      _
    $region31: #{bilstm_attn_forward.1} parent=1 // pred_check_branch
      %34 = sbr.rel (0) target = $region33
    $region32: #{bilstm_attn_forward.1} parent=1 // pred_region
      _
    $region33: #{bilstm_attn_forward.1} parent=1 // pred_fallthru
      _
    // Predicated region
    $region34: #{bilstm_attn_forward.1} parent=1 // pred_check
      _
    $region35: #{bilstm_attn_forward.1} parent=1 // pred_check_branch
      %36 = sbr.rel (0) target = $region37
    $region36: #{bilstm_attn_forward.1} parent=1 // pred_region
      _
    $region37: #{bilstm_attn_forward.1} parent=1 // pred_fallthru
      _
    // Predicated region
    $region38: #{bilstm_attn_forward.1} parent=1 // pred_check
      _
    $region39: #{bilstm_attn_forward.1} parent=1 // pred_check_branch
      %38 = sbr.rel (0) target = $region41
    $region40: #{bilstm_attn_forward.1} parent=1 // pred_region
      _
    $region41: #{bilstm_attn_forward.1} parent=1 // pred_fallthru
      _
    // Predicated region
    $region42: #{bilstm_attn_forward.1} parent=1 // pred_check
      _
    $region43: #{bilstm_attn_forward.1} parent=1 // pred_check_branch
      %40 = sbr.rel (0) target = $region45
    $region44: #{bilstm_attn_forward.1} parent=1 // pred_region
      _
    $region45: #{bilstm_attn_forward.1} parent=1 // pred_fallthru
      _
    // Predicated region
    $region46: #{bilstm_attn_forward.1} parent=1 // pred_check
      _
    $region47: #{bilstm_attn_forward.1} parent=1 // pred_check_branch
      %42 = sbr.rel (0) target = $region49
    $region48: #{bilstm_attn_forward.1} parent=1 // pred_region
      _
    $region49: #{bilstm_attn_forward.1} parent=1 // pred_fallthru
      _
    // Predicated region
    $region50: #{bilstm_attn_forward.1} parent=1 // pred_check
      _
    $region51: #{bilstm_attn_forward.1} parent=1 // pred_check_branch
      %44 = sbr.rel (0) target = $region53
    $region52: #{bilstm_attn_forward.1} parent=1 // pred_region
      _
    $region53: #{bilstm_attn_forward.1} parent=1 // pred_fallthru
      _
    %v46 = vld [vmem:[%s0] sm:$0xf]
    %v47 = vld [vmem:[%s0 + $0x4] sm:$0xf]
    %v48 = vld [vmem:[%s0 + $0x8] sm:$0xf]
    %v49 = vld [vmem:[%s0 + $0xc] sm:$0xf]
    %v50 = vld [vmem:[%s0 + $0x10] sm:$0xf]
    %v51 = vld [vmem:[%s0 + $0x14] sm:$0xf]
    %v52 = vld [vmem:[%s0 + $0x18] sm:$0xf]
    %v53 = vld [vmem:[%s0 + $0x1c] sm:$0xf]
    %v54 = vld [vmem:[%s1] sm:$0xff]
    %v55 = vld [vmem:[%s1 + $0x8] sm:$0xff]
    %v56 = vld [vmem:[%s1 + $0x10] sm:$0xff]
    %v57 = vld [vmem:[%s1 + $0x18] sm:$0xff]
    %v58 = vld [vmem:[%s1 + $0x20] sm:$0xff]
    %v59 = vld [vmem:[%s1 + $0x28] sm:$0xff]
    %v60 = vld [vmem:[%s1 + $0x30] sm:$0xff]
    %v61 = vld [vmem:[%s1 + $0x38] sm:$0xff]
    %v70 = vunpack.c.l.b16 %v46
    %v71 = vunpack.c.l.b16 %v47
    %v72 = vunpack.c.l.b16 %v48
    %v73 = vunpack.c.l.b16 %v49
    %v74 = vunpack.c.l.b16 %v50
    %v75 = vunpack.c.l.b16 %v51
    %v76 = vunpack.c.l.b16 %v52
    %v77 = vunpack.c.l.b16 %v53
    %v78 = vpack.c.b16 %v71, %v70
    %v79 = vpack.c.b16 %v73, %v72
    %v80 = vpack.c.b16 %v75, %v74
    %v81 = vpack.c.b16 %v77, %v76
    %v90 = vunpack.c.l.b16 %v54
    %v91 = vunpack.c.h.b16 %v54
    %v92 = vunpack.c.l.b16 %v55
    %v93 = vunpack.c.h.b16 %v55
    %v94 = vunpack.c.l.b16 %v56
    %v95 = vunpack.c.h.b16 %v56
    %v96 = vunpack.c.l.b16 %v57
    %v97 = vunpack.c.h.b16 %v57
    %v98 = vunpack.c.l.b16 %v58
    %v99 = vunpack.c.h.b16 %v58
    %v100 = vunpack.c.l.b16 %v59
    %v101 = vunpack.c.h.b16 %v59
    %v102 = vunpack.c.l.b16 %v60
    %v103 = vunpack.c.h.b16 %v60
    %v104 = vunpack.c.l.b16 %v61
    %v105 = vunpack.c.h.b16 %v61
    %v106 = vpack.c.b16 %v94, %v90
    %v107 = vpack.c.b16 %v95, %v91
    %v108 = vpack.c.b16 %v96, %v92
    %v109 = vpack.c.b16 %v97, %v93
    %v110 = vpack.c.b16 %v102, %v98
    %v111 = vpack.c.b16 %v103, %v99
    %v112 = vpack.c.b16 %v104, %v100
    %v113 = vpack.c.b16 %v105, %v101
    %vm122 = vcmask 261120
    %v124 = vsel %vm122, %v78, 0
    %v127 = vsel %vm122, %v79, 0
    %v130 = vsel %vm122, %v80, 0
    %v133 = vsel %vm122, %v81, 0
    %135 = vmatprep.subr.bf16.mxu0 %v107
    %136 = vmatpush1.bf16.msra.mxu0 %v106
    %137 = vmatprep.subr.bf16.mxu0 %v111
    %138 = vmatpush1.bf16.msra.mxu0 %v110
    %139 = vmatprep.subr.bf16.mxu0 0
    %140 = vmatpush1.bf16.msra.mxu0 0
    %141 = vmatprep.subr.bf16.mxu0 0
    %142 = vmatpush1.bf16.msra.mxu0 0
    %143 = vmatprep.subr.bf16.mxu0 0
    %144 = vmatpush1.bf16.msra.mxu0 0
    %145 = vmatprep.subr.bf16.mxu0 0
    %146 = vmatpush1.bf16.msra.mxu0 0
    %147 = vmatprep.subr.bf16.mxu0 0
    %148 = vmatpush1.bf16.msra.mxu0 0
    %149 = vmatprep.subr.bf16.mxu0 0
    %150 = vmatpush1.bf16.msra.mxu0 0
    %151 = vmatprep.subr.bf16.mxu0 0
    %152 = vmatpush1.bf16.msra.mxu0 0
    %153 = vmatprep.subr.bf16.mxu0 0
    %154 = vmatpush1.bf16.msra.mxu0 0
    %155 = vmatprep.subr.bf16.mxu0 0
    %156 = vmatpush1.bf16.msra.mxu0 0
    %157 = vmatprep.subr.bf16.mxu0 0
    %158 = vmatpush1.bf16.msra.mxu0 0
    %159 = vmatprep.subr.bf16.mxu0 0
    %160 = vmatpush1.bf16.msra.mxu0 0
    %161 = vmatprep.subr.bf16.mxu0 0
    %162 = vmatpush1.bf16.msra.mxu0 0
    %163 = vmatprep.subr.bf16.mxu0 0
    %164 = vmatpush1.bf16.msra.mxu0 0
    %165 = vmatprep.subr.bf16.mxu0 0
    %166 = vmatpush1.bf16.msra.mxu0 0
    %167 = vmatprep.mubr.bf16.mxu0 0
    %168 = vmatmul.mubr.bf16.gmra.mrb[0].mxu0 %v124
    %v169 = vpop.f32.mrb[0].mxu0
    %v170 = vadd.f32 0.0, %v169
    %v171 = vpop.f32.mrb[0].mxu0
    %v172 = vadd.f32 0.0, %v171
    %v173 = vpop.f32.mrb[0].mxu0
    %v174 = vadd.f32 0.0, %v173
    %v175 = vpop.f32.mrb[0].mxu0
    %v176 = vadd.f32 0.0, %v175
    %177 = vmatprep.mubr.bf16.mxu0 0
    %178 = vmatmul.mubr.bf16.gmra.mrb[0].mxu0 %v127
    %v179 = vpop.f32.mrb[0].mxu0
    %v180 = vadd.f32 0.0, %v179
    %v181 = vpop.f32.mrb[0].mxu0
    %v182 = vadd.f32 0.0, %v181
    %v183 = vpop.f32.mrb[0].mxu0
    %v184 = vadd.f32 0.0, %v183
    %v185 = vpop.f32.mrb[0].mxu0
    %v186 = vadd.f32 0.0, %v185
    %187 = vmatprep.mubr.bf16.mxu0 0
    %188 = vmatmul.mubr.bf16.gmra.mrb[0].mxu0 %v130
    %v189 = vpop.f32.mrb[0].mxu0
    %v190 = vadd.f32 0.0, %v189
    %v191 = vpop.f32.mrb[0].mxu0
    %v192 = vadd.f32 0.0, %v191
    %v193 = vpop.f32.mrb[0].mxu0
    %v194 = vadd.f32 0.0, %v193
    %v195 = vpop.f32.mrb[0].mxu0
    %v196 = vadd.f32 0.0, %v195
    %197 = vmatprep.mubr.bf16.mxu0 0
    %198 = vmatmul.mubr.bf16.gmra.mrb[0].mxu0 %v133
    %v199 = vpop.f32.mrb[0].mxu0
    %v200 = vadd.f32 0.0, %v199
    %v201 = vpop.f32.mrb[0].mxu0
    %v202 = vadd.f32 0.0, %v201
    %v203 = vpop.f32.mrb[0].mxu0
    %v204 = vadd.f32 0.0, %v203
    %v205 = vpop.f32.mrb[0].mxu0
    %v206 = vadd.f32 0.0, %v205
    %207 = vdwg.mxu0
    %208 = vmatprep.subr.bf16.mxu0 %v109
    %209 = vmatpush1.bf16.msra.mxu0 %v108
    %210 = vmatprep.subr.bf16.mxu0 %v113
    %211 = vmatpush1.bf16.msra.mxu0 %v112
    %212 = vmatprep.subr.bf16.mxu0 0
    %213 = vmatpush1.bf16.msra.mxu0 0
    %214 = vmatprep.subr.bf16.mxu0 0
    %215 = vmatpush1.bf16.msra.mxu0 0
    %216 = vmatprep.subr.bf16.mxu0 0
    %217 = vmatpush1.bf16.msra.mxu0 0
    %218 = vmatprep.subr.bf16.mxu0 0
    %219 = vmatpush1.bf16.msra.mxu0 0
    %220 = vmatprep.subr.bf16.mxu0 0
    %221 = vmatpush1.bf16.msra.mxu0 0
    %222 = vmatprep.subr.bf16.mxu0 0
    %223 = vmatpush1.bf16.msra.mxu0 0
    %224 = vmatprep.subr.bf16.mxu0 0
    %225 = vmatpush1.bf16.msra.mxu0 0
    %226 = vmatprep.subr.bf16.mxu0 0
    %227 = vmatpush1.bf16.msra.mxu0 0
    %228 = vmatprep.subr.bf16.mxu0 0
    %229 = vmatpush1.bf16.msra.mxu0 0
    %230 = vmatprep.subr.bf16.mxu0 0
    %231 = vmatpush1.bf16.msra.mxu0 0
    %232 = vmatprep.subr.bf16.mxu0 0
    %233 = vmatpush1.bf16.msra.mxu0 0
    %234 = vmatprep.subr.bf16.mxu0 0
    %235 = vmatpush1.bf16.msra.mxu0 0
    %236 = vmatprep.subr.bf16.mxu0 0
    %237 = vmatpush1.bf16.msra.mxu0 0
    %238 = vmatprep.subr.bf16.mxu0 0
    %239 = vmatpush1.bf16.msra.mxu0 0
    %240 = vmatprep.mubr.bf16.mxu0 0
    %241 = vmatmul.mubr.bf16.gmra.mrb[0].mxu0 %v124
    %v242 = vpop.f32.mrb[0].mxu0
    %v243 = vadd.f32 0.0, %v242
    %v244 = vpop.f32.mrb[0].mxu0
    %v245 = vadd.f32 0.0, %v244
    %v246 = vpop.f32.mrb[0].mxu0
    %v247 = vadd.f32 0.0, %v246
    %v248 = vpop.f32.mrb[0].mxu0
    %v249 = vadd.f32 0.0, %v248
    %250 = vmatprep.mubr.bf16.mxu0 0
    %251 = vmatmul.mubr.bf16.gmra.mrb[0].mxu0 %v127
    %v252 = vpop.f32.mrb[0].mxu0
    %v253 = vadd.f32 0.0, %v252
    %v254 = vpop.f32.mrb[0].mxu0
    %v255 = vadd.f32 0.0, %v254
    %v256 = vpop.f32.mrb[0].mxu0
    %v257 = vadd.f32 0.0, %v256
    %v258 = vpop.f32.mrb[0].mxu0
    %v259 = vadd.f32 0.0, %v258
    %260 = vmatprep.mubr.bf16.mxu0 0
    %261 = vmatmul.mubr.bf16.gmra.mrb[0].mxu0 %v130
    %v262 = vpop.f32.mrb[0].mxu0
    %v263 = vadd.f32 0.0, %v262
    %v264 = vpop.f32.mrb[0].mxu0
    %v265 = vadd.f32 0.0, %v264
    %v266 = vpop.f32.mrb[0].mxu0
    %v267 = vadd.f32 0.0, %v266
    %v268 = vpop.f32.mrb[0].mxu0
    %v269 = vadd.f32 0.0, %v268
    %270 = vmatprep.mubr.bf16.mxu0 0
    %271 = vmatmul.mubr.bf16.gmra.mrb[0].mxu0 %v133
    %v272 = vpop.f32.mrb[0].mxu0
    %v273 = vadd.f32 0.0, %v272
    %v274 = vpop.f32.mrb[0].mxu0
    %v275 = vadd.f32 0.0, %v274
    %v276 = vpop.f32.mrb[0].mxu0
    %v277 = vadd.f32 0.0, %v276
    %v278 = vpop.f32.mrb[0].mxu0
    %v279 = vadd.f32 0.0, %v278
    %280 = vdwg.mxu0
    %281 = vst [vmem:[#allocation2] sm:$0xff] %v170
    %282 = vst [vmem:[#allocation2 + $0x8] sm:$0xff] %v172
    %283 = vst [vmem:[#allocation2 + $0x10] sm:$0xff] %v243
    %284 = vst [vmem:[#allocation2 + $0x18] sm:$0xff] %v245
    %285 = vst [vmem:[#allocation2 + $0x20] sm:$0xff] %v174
    %286 = vst [vmem:[#allocation2 + $0x28] sm:$0xff] %v176
    %287 = vst [vmem:[#allocation2 + $0x30] sm:$0xff] %v247
    %288 = vst [vmem:[#allocation2 + $0x38] sm:$0xff] %v249
    %289 = vst [vmem:[#allocation2 + $0x40] sm:$0xff] %v180
    %290 = vst [vmem:[#allocation2 + $0x48] sm:$0xff] %v182
    %291 = vst [vmem:[#allocation2 + $0x50] sm:$0xff] %v253
    %292 = vst [vmem:[#allocation2 + $0x58] sm:$0xff] %v255
    %293 = vst [vmem:[#allocation2 + $0x60] sm:$0xff] %v184
    %294 = vst [vmem:[#allocation2 + $0x68] sm:$0xff] %v186
    %295 = vst [vmem:[#allocation2 + $0x70] sm:$0xff] %v257
    %296 = vst [vmem:[#allocation2 + $0x78] sm:$0xff] %v259
    %297 = vst [vmem:[#allocation2 + $0x80] sm:$0xff] %v190
    %298 = vst [vmem:[#allocation2 + $0x88] sm:$0xff] %v192
    %299 = vst [vmem:[#allocation2 + $0x90] sm:$0xff] %v263
    %300 = vst [vmem:[#allocation2 + $0x98] sm:$0xff] %v265
    %301 = vst [vmem:[#allocation2 + $0xa0] sm:$0xff] %v194
    %302 = vst [vmem:[#allocation2 + $0xa8] sm:$0xff] %v196
    %303 = vst [vmem:[#allocation2 + $0xb0] sm:$0xff] %v267
    %304 = vst [vmem:[#allocation2 + $0xb8] sm:$0xff] %v269
    %305 = vst [vmem:[#allocation2 + $0xc0] sm:$0xff] %v200
    %306 = vst [vmem:[#allocation2 + $0xc8] sm:$0xff] %v202
    %307 = vst [vmem:[#allocation2 + $0xd0] sm:$0xff] %v273
    %308 = vst [vmem:[#allocation2 + $0xd8] sm:$0xff] %v275
    %309 = vst [vmem:[#allocation2 + $0xe0] sm:$0xff] %v204
    %310 = vst [vmem:[#allocation2 + $0xe8] sm:$0xff] %v206
    %311 = vst [vmem:[#allocation2 + $0xf0] sm:$0xff] %v277
    %312 = vst [vmem:[#allocation2 + $0xf8] sm:$0xff] %v279
    %v313 = vld [vmem:[%s3] sm:$0x3]
    %v315 = vlaneseq
    %v316 = vshrl.u32 %v315, 7
    %v317 = vsub.s32 0, %v316
    %v318 = vrot.slane %v313, %v317
    %v319 = vlaneseq
    %v320 = vshrl.u32 %v319, 7
    %v321 = vsub.s32 1, %v320
    %v322 = vrot.slane %v313, %v321
    %v325 = vld [vmem:[#allocation2] sm:$0xff]
    %v326 = vld [vmem:[#allocation2 + $0x8] sm:$0xff]
    %v327 = vld [vmem:[#allocation2 + $0xf0] sm:$0xff]
    %v328 = vld [vmem:[#allocation2 + $0xf8] sm:$0xff]
    %v329 = vadd.f32 %v325, %v327
    %v330 = vadd.f32 %v326, %v328
    %v331 = vadd.f32 %v329, %v318
    %v332 = vadd.f32 %v330, %v322
    %333 = vst [vmem:[#allocation2] sm:$0xff] %v331
    %334 = vst [vmem:[#allocation2 + $0x8] sm:$0xff] %v332
    %v335 = vld [vmem:[#allocation2 + $0x20] sm:$0xff]
    %v336 = vld [vmem:[#allocation2 + $0x28] sm:$0xff]
    %v337 = vld [vmem:[#allocation2 + $0xd0] sm:$0xff]
    %v338 = vld [vmem:[#allocation2 + $0xd8] sm:$0xff]
    %v339 = vadd.f32 %v335, %v337
    %v340 = vadd.f32 %v336, %v338
    %v341 = vadd.f32 %v339, %v318
    %v342 = vadd.f32 %v340, %v322
    %343 = vst [vmem:[#allocation2 + $0x20] sm:$0xff] %v341
    %344 = vst [vmem:[#allocation2 + $0x28] sm:$0xff] %v342
    %v345 = vld [vmem:[#allocation2 + $0x40] sm:$0xff]
    %v346 = vld [vmem:[#allocation2 + $0x48] sm:$0xff]
    %v347 = vld [vmem:[#allocation2 + $0xb0] sm:$0xff]
    %v348 = vld [vmem:[#allocation2 + $0xb8] sm:$0xff]
    %v349 = vadd.f32 %v345, %v347
    %v350 = vadd.f32 %v346, %v348
    %v351 = vadd.f32 %v349, %v318
    %v352 = vadd.f32 %v350, %v322
    %353 = vst [vmem:[#allocation2 + $0x40] sm:$0xff] %v351
    %354 = vst [vmem:[#allocation2 + $0x48] sm:$0xff] %v352
    %v355 = vld [vmem:[#allocation2 + $0x60] sm:$0xff]
    %v356 = vld [vmem:[#allocation2 + $0x68] sm:$0xff]
    %v357 = vld [vmem:[#allocation2 + $0x90] sm:$0xff]
    %v358 = vld [vmem:[#allocation2 + $0x98] sm:$0xff]
    %v359 = vadd.f32 %v355, %v357
    %v360 = vadd.f32 %v356, %v358
    %v361 = vadd.f32 %v359, %v318
    %v362 = vadd.f32 %v360, %v322
    %363 = vst [vmem:[#allocation2 + $0x60] sm:$0xff] %v361
    %364 = vst [vmem:[#allocation2 + $0x68] sm:$0xff] %v362
    %v365 = vld [vmem:[#allocation2 + $0x80] sm:$0xff]
    %v366 = vld [vmem:[#allocation2 + $0x88] sm:$0xff]
    %v367 = vld [vmem:[#allocation2 + $0x70] sm:$0xff]
    %v368 = vld [vmem:[#allocation2 + $0x78] sm:$0xff]
    %v369 = vadd.f32 %v365, %v367
    %v370 = vadd.f32 %v366, %v368
    %v371 = vadd.f32 %v369, %v318
    %v372 = vadd.f32 %v370, %v322
    %373 = vst [vmem:[#allocation2 + $0x80] sm:$0xff] %v371
    %374 = vst [vmem:[#allocation2 + $0x88] sm:$0xff] %v372
    %v375 = vld [vmem:[#allocation2 + $0xa0] sm:$0xff]
    %v376 = vld [vmem:[#allocation2 + $0xa8] sm:$0xff]
    %v377 = vld [vmem:[#allocation2 + $0x50] sm:$0xff]
    %v378 = vld [vmem:[#allocation2 + $0x58] sm:$0xff]
    %v379 = vadd.f32 %v375, %v377
    %v380 = vadd.f32 %v376, %v378
    %v381 = vadd.f32 %v379, %v318
    %v382 = vadd.f32 %v380, %v322
    %383 = vst [vmem:[#allocation2 + $0xa0] sm:$0xff] %v381
    %384 = vst [vmem:[#allocation2 + $0xa8] sm:$0xff] %v382
    %v385 = vld [vmem:[#allocation2 + $0xc0] sm:$0xff]
    %v386 = vld [vmem:[#allocation2 + $0xc8] sm:$0xff]
    %v387 = vld [vmem:[#allocation2 + $0x30] sm:$0xff]
    %v388 = vld [vmem:[#allocation2 + $0x38] sm:$0xff]
    %v389 = vadd.f32 %v385, %v387
    %v390 = vadd.f32 %v386, %v388
    %v391 = vadd.f32 %v389, %v318
    %v392 = vadd.f32 %v390, %v322
    %393 = vst [vmem:[#allocation2 + $0xc0] sm:$0xff] %v391
    %394 = vst [vmem:[#allocation2 + $0xc8] sm:$0xff] %v392
    %v395 = vld [vmem:[#allocation2 + $0xe0] sm:$0xff]
    %v396 = vld [vmem:[#allocation2 + $0xe8] sm:$0xff]
    %v397 = vld [vmem:[#allocation2 + $0x10] sm:$0xff]
    %v398 = vld [vmem:[#allocation2 + $0x18] sm:$0xff]
    %v399 = vadd.f32 %v395, %v397
    %v400 = vadd.f32 %v396, %v398
    %v401 = vadd.f32 %v399, %v318
    %v402 = vadd.f32 %v400, %v322
    %403 = vst [vmem:[#allocation2 + $0xe0] sm:$0xff] %v401
    %404 = vst [vmem:[#allocation2 + $0xe8] sm:$0xff] %v402
    %v405 = vlaneseq
    %v406 = vand.u32 %v405, 127
    %v407 = vadd.s32 %v406, 128
    %vm408 = vcmp.ge.s32.totalorder %v406, 128
    %vm409 = vcmp.ge.s32.totalorder %v407, 128
    %vm410 = vcmp.lt.s32.totalorder %v406, 192
    %vm411 = vcmp.lt.s32.totalorder %v407, 192
    %vm412 = vmand %vm408, %vm410
    %vm413 = vmand %vm409, %vm411
    %vm414 = vcmp.lt.s32.totalorder %v406, 64
    %v415 = vld [vmem:[%s2] sm:$0xff]
    %v416 = vld [vmem:[%s2 + $0x8] sm:$0xff]
    %v417 = vld [vmem:[%s2 + $0x10] sm:$0xff]
    %v418 = vld [vmem:[%s2 + $0x18] sm:$0xff]
    %v419 = vld [vmem:[%s2 + $0x20] sm:$0xff]
    %v420 = vld [vmem:[%s2 + $0x28] sm:$0xff]
    %v421 = vld [vmem:[%s2 + $0x30] sm:$0xff]
    %v422 = vld [vmem:[%s2 + $0x38] sm:$0xff]
    %v423 = vld [vmem:[%s2 + $0x40] sm:$0xff]
    %v424 = vld [vmem:[%s2 + $0x48] sm:$0xff]
    %v425 = vld [vmem:[%s2 + $0x50] sm:$0xff]
    %v426 = vld [vmem:[%s2 + $0x58] sm:$0xff]
    %v427 = vld [vmem:[%s2 + $0x60] sm:$0xff]
    %v428 = vld [vmem:[%s2 + $0x68] sm:$0xff]
    %v429 = vld [vmem:[%s2 + $0x70] sm:$0xff]
    %v430 = vld [vmem:[%s2 + $0x78] sm:$0xff]
    %v431 = vld [vmem:[#allocation2] sm:$0xff]
    %v432 = vld [vmem:[#allocation2 + $0x8] sm:$0xff]
    %v449 = vunpack.c.l.b16 %v415
    %v450 = vunpack.c.h.b16 %v415
    %v451 = vunpack.c.l.b16 %v416
    %v452 = vunpack.c.h.b16 %v416
    %v453 = vunpack.c.l.b16 %v417
    %v454 = vunpack.c.h.b16 %v417
    %v455 = vunpack.c.l.b16 %v418
    %v456 = vunpack.c.h.b16 %v418
    %v457 = vunpack.c.l.b16 %v419
    %v458 = vunpack.c.h.b16 %v419
    %v459 = vunpack.c.l.b16 %v420
    %v460 = vunpack.c.h.b16 %v420
    %v461 = vunpack.c.l.b16 %v421
    %v462 = vunpack.c.h.b16 %v421
    %v463 = vunpack.c.l.b16 %v422
    %v464 = vunpack.c.h.b16 %v422
    %v465 = vunpack.c.l.b16 %v423
    %v466 = vunpack.c.h.b16 %v423
    %v467 = vunpack.c.l.b16 %v424
    %v468 = vunpack.c.h.b16 %v424
    %v469 = vunpack.c.l.b16 %v425
    %v470 = vunpack.c.h.b16 %v425
    %v471 = vunpack.c.l.b16 %v426
    %v472 = vunpack.c.h.b16 %v426
    %v473 = vunpack.c.l.b16 %v427
    %v474 = vunpack.c.h.b16 %v427
    %v475 = vunpack.c.l.b16 %v428
    %v476 = vunpack.c.h.b16 %v428
    %v477 = vunpack.c.l.b16 %v429
    %v478 = vunpack.c.h.b16 %v429
    %v479 = vunpack.c.l.b16 %v430
    %v480 = vunpack.c.h.b16 %v430
    %v481 = vpack.c.b16 %v451, %v449
    %v482 = vpack.c.b16 %v452, %v450
    %v483 = vpack.c.b16 %v455, %v453
    %v484 = vpack.c.b16 %v456, %v454
    %v485 = vpack.c.b16 %v459, %v457
    %v486 = vpack.c.b16 %v460, %v458
    %v487 = vpack.c.b16 %v463, %v461
    %v488 = vpack.c.b16 %v464, %v462
    %v489 = vpack.c.b16 %v467, %v465
    %v490 = vpack.c.b16 %v468, %v466
    %v491 = vpack.c.b16 %v471, %v469
    %v492 = vpack.c.b16 %v472, %v470
    %v493 = vpack.c.b16 %v475, %v473
    %v494 = vpack.c.b16 %v476, %v474
    %v495 = vpack.c.b16 %v479, %v477
    %v496 = vpack.c.b16 %v480, %v478
    %513 = vmatprep.subr.bf16.mxu0 %v482
    %514 = vmatpush1.bf16.msra.mxu0 %v481
    %515 = vmatprep.subr.bf16.mxu0 %v484
    %516 = vmatpush1.bf16.msra.mxu0 %v483
    %517 = vmatprep.subr.bf16.mxu0 %v486
    %518 = vmatpush1.bf16.msra.mxu0 %v485
    %519 = vmatprep.subr.bf16.mxu0 %v488
    %520 = vmatpush1.bf16.msra.mxu0 %v487
    %521 = vmatprep.subr.bf16.mxu0 %v490
    %522 = vmatpush1.bf16.msra.mxu0 %v489
    %523 = vmatprep.subr.bf16.mxu0 %v492
    %524 = vmatpush1.bf16.msra.mxu0 %v491
    %525 = vmatprep.subr.bf16.mxu0 %v494
    %526 = vmatpush1.bf16.msra.mxu0 %v493
    %527 = vmatprep.subr.bf16.mxu0 %v496
    %528 = vmatpush1.bf16.msra.mxu0 %v495
    %529 = vmatprep.subr.bf16.mxu0 0
    %530 = vmatpush1.bf16.msra.mxu0 0
    %531 = vmatprep.subr.bf16.mxu0 0
    %532 = vmatpush1.bf16.msra.mxu0 0
    %533 = vmatprep.subr.bf16.mxu0 0
    %534 = vmatpush1.bf16.msra.mxu0 0
    %535 = vmatprep.subr.bf16.mxu0 0
    %536 = vmatpush1.bf16.msra.mxu0 0
    %537 = vmatprep.subr.bf16.mxu0 0
    %538 = vmatpush1.bf16.msra.mxu0 0
    %539 = vmatprep.subr.bf16.mxu0 0
    %540 = vmatpush1.bf16.msra.mxu0 0
    %541 = vmatprep.subr.bf16.mxu0 0
    %542 = vmatpush1.bf16.msra.mxu0 0
    %543 = vmatprep.subr.bf16.mxu0 0
    %544 = vmatpush1.bf16.msra.mxu0 0
    %545 = vmatprep.mubr.bf16.mxu0 0
    %546 = vmatmul.mubr.bf16.gmra.mrb[0].mxu0 0
    %v547 = vpop.f32.mrb[0].mxu0
    %v548 = vadd.f32 0.0, %v547
    %v549 = vpop.f32.mrb[0].mxu0
    %v550 = vadd.f32 0.0, %v549
    %v551 = vpop.f32.mrb[0].mxu0
    %v552 = vpop.f32.mrb[0].mxu0
    %553 = vdwg.mxu0
    %v554 = vadd.f32 %v431, %v548
    %v555 = vadd.f32 %v432, %v550
    %v556 = vtanh.pop %v554
    %v557 = vtanh.pop %v555
    %v558 = vxor.u32 %v554, 2147483648
    %v559 = vxor.u32 %v555, 2147483648
    %v560 = vmul.f32 %v558, 1.442695
    %v561 = vpow.pop %v560
    %v562 = vmul.f32 %v559, 1.442695
    %v563 = vpow.pop %v562
    %v564 = vadd.f32 %v561, 1.0
    %v565 = vadd.f32 %v563, 1.0
    %v566 = vrcp.pop %v564
    %v567 = vmul.f32 1.0, %v566
    %v568 = vrcp.pop %v565
    %v569 = vmul.f32 1.0, %v568
    %v570 = vsel %vm412, %v556, %v567
    %v571 = vsel %vm413, %v557, %v569
    %v572 = vmul.f32 %v570, %v571
    %v573 = vmul.f32 %v570, 0.0
    %574 = vrot.lane.b32.xlu0 %v573, 64
    %v575 = vpop.permute.xlu0 %574
    %v576 = vadd.f32 %v572, %v575
    %577 = vrot.lane.b32.xlu0 %v576, 64
    %v578 = vpop.permute.xlu0 %577
    %v579 = vsel %vm414, %v576, %v578
    %580 = vrot.lane.b32.xlu0 %v571, 64
    %v581 = vpop.permute.xlu0 %580
    %v582 = vsel %vm414, %v581, %v571
    %v583 = vtanh.pop %v579
    %v584 = vmul.f32 %v582, %v583
    %v585 = vld [vmem:[#allocation2 + $0x20] sm:$0xff]
    %v586 = vld [vmem:[#allocation2 + $0x28] sm:$0xff]
    %v587 = vpack.c.bf16 %v584, %v584
    %588 = vmatprep.subr.bf16.mxu0 %v482
    %589 = vmatpush1.bf16.msra.mxu0 %v481
    %590 = vmatprep.subr.bf16.mxu0 %v484
    %591 = vmatpush1.bf16.msra.mxu0 %v483
    %592 = vmatprep.subr.bf16.mxu0 %v486
    %593 = vmatpush1.bf16.msra.mxu0 %v485
    %594 = vmatprep.subr.bf16.mxu0 %v488
    %595 = vmatpush1.bf16.msra.mxu0 %v487
    %596 = vmatprep.subr.bf16.mxu0 %v490
    %597 = vmatpush1.bf16.msra.mxu0 %v489
    %598 = vmatprep.subr.bf16.mxu0 %v492
    %599 = vmatpush1.bf16.msra.mxu0 %v491
    %600 = vmatprep.subr.bf16.mxu0 %v494
    %601 = vmatpush1.bf16.msra.mxu0 %v493
    %602 = vmatprep.subr.bf16.mxu0 %v496
    %603 = vmatpush1.bf16.msra.mxu0 %v495
    %604 = vmatprep.subr.bf16.mxu0 0
    %605 = vmatpush1.bf16.msra.mxu0 0
    %606 = vmatprep.subr.bf16.mxu0 0
    %607 = vmatpush1.bf16.msra.mxu0 0
    %608 = vmatprep.subr.bf16.mxu0 0
    %609 = vmatpush1.bf16.msra.mxu0 0
    %610 = vmatprep.subr.bf16.mxu0 0
    %611 = vmatpush1.bf16.msra.mxu0 0
    %612 = vmatprep.subr.bf16.mxu0 0
    %613 = vmatpush1.bf16.msra.mxu0 0
    %614 = vmatprep.subr.bf16.mxu0 0
    %615 = vmatpush1.bf16.msra.mxu0 0
    %616 = vmatprep.subr.bf16.mxu0 0
    %617 = vmatpush1.bf16.msra.mxu0 0
    %618 = vmatprep.subr.bf16.mxu0 0
    %619 = vmatpush1.bf16.msra.mxu0 0
    %620 = vmatprep.mubr.bf16.mxu0 0
    %621 = vmatmul.mubr.bf16.gmra.mrb[0].mxu0 %v587
    %v622 = vpop.f32.mrb[0].mxu0
    %v623 = vadd.f32 0.0, %v622
    %v624 = vpop.f32.mrb[0].mxu0
    %v625 = vadd.f32 0.0, %v624
    %v626 = vpop.f32.mrb[0].mxu0
    %v627 = vpop.f32.mrb[0].mxu0
    %628 = vdwg.mxu0
    %v629 = vadd.f32 %v585, %v623
    %v630 = vadd.f32 %v586, %v625
    %v631 = vtanh.pop %v629
    %v632 = vtanh.pop %v630
    %v633 = vxor.u32 %v629, 2147483648
    %v634 = vxor.u32 %v630, 2147483648
    %v635 = vmul.f32 %v633, 1.442695
    %v636 = vpow.pop %v635
    %v637 = vmul.f32 %v634, 1.442695
    %v638 = vpow.pop %v637
    %v639 = vadd.f32 %v636, 1.0
    %v640 = vadd.f32 %v638, 1.0
    %v641 = vrcp.pop %v639
    %v642 = vmul.f32 1.0, %v641
    %v643 = vrcp.pop %v640
    %v644 = vmul.f32 1.0, %v643
    %v645 = vsel %vm412, %v631, %v642
    %v646 = vsel %vm413, %v632, %v644
    %v647 = vmul.f32 %v645, %v646
    %v648 = vmul.f32 %v645, %v579
    %649 = vrot.lane.b32.xlu0 %v648, 64
    %v650 = vpop.permute.xlu0 %649
    %v651 = vadd.f32 %v647, %v650
    %652 = vrot.lane.b32.xlu0 %v651, 64
    %v653 = vpop.permute.xlu0 %652
    %v654 = vsel %vm414, %v651, %v653
    %655 = vrot.lane.b32.xlu0 %v646, 64
    %v656 = vpop.permute.xlu0 %655
    %v657 = vsel %vm414, %v656, %v646
    %v658 = vtanh.pop %v654
    %v659 = vmul.f32 %v657, %v658
    %v660 = vld [vmem:[#allocation2 + $0x40] sm:$0xff]
    %v661 = vld [vmem:[#allocation2 + $0x48] sm:$0xff]
    %v662 = vpack.c.bf16 %v659, %v659
    %663 = vmatprep.subr.bf16.mxu0 %v482
    %664 = vmatpush1.bf16.msra.mxu0 %v481
    %665 = vmatprep.subr.bf16.mxu0 %v484
    %666 = vmatpush1.bf16.msra.mxu0 %v483
    %667 = vmatprep.subr.bf16.mxu0 %v486
    %668 = vmatpush1.bf16.msra.mxu0 %v485
    %669 = vmatprep.subr.bf16.mxu0 %v488
    %670 = vmatpush1.bf16.msra.mxu0 %v487
    %671 = vmatprep.subr.bf16.mxu0 %v490
    %672 = vmatpush1.bf16.msra.mxu0 %v489
    %673 = vmatprep.subr.bf16.mxu0 %v492
    %674 = vmatpush1.bf16.msra.mxu0 %v491
    %675 = vmatprep.subr.bf16.mxu0 %v494
    %676 = vmatpush1.bf16.msra.mxu0 %v493
    %677 = vmatprep.subr.bf16.mxu0 %v496
    %678 = vmatpush1.bf16.msra.mxu0 %v495
    %679 = vmatprep.subr.bf16.mxu0 0
    %680 = vmatpush1.bf16.msra.mxu0 0
    %681 = vmatprep.subr.bf16.mxu0 0
    %682 = vmatpush1.bf16.msra.mxu0 0
    %683 = vmatprep.subr.bf16.mxu0 0
    %684 = vmatpush1.bf16.msra.mxu0 0
    %685 = vmatprep.subr.bf16.mxu0 0
    %686 = vmatpush1.bf16.msra.mxu0 0
    %687 = vmatprep.subr.bf16.mxu0 0
    %688 = vmatpush1.bf16.msra.mxu0 0
    %689 = vmatprep.subr.bf16.mxu0 0
    %690 = vmatpush1.bf16.msra.mxu0 0
    %691 = vmatprep.subr.bf16.mxu0 0
    %692 = vmatpush1.bf16.msra.mxu0 0
    %693 = vmatprep.subr.bf16.mxu0 0
    %694 = vmatpush1.bf16.msra.mxu0 0
    %695 = vmatprep.mubr.bf16.mxu0 0
    %696 = vmatmul.mubr.bf16.gmra.mrb[0].mxu0 %v662
    %v697 = vpop.f32.mrb[0].mxu0
    %v698 = vadd.f32 0.0, %v697
    %v699 = vpop.f32.mrb[0].mxu0
    %v700 = vadd.f32 0.0, %v699
    %v701 = vpop.f32.mrb[0].mxu0
    %v702 = vpop.f32.mrb[0].mxu0
    %703 = vdwg.mxu0
    %v704 = vadd.f32 %v660, %v698
    %v705 = vadd.f32 %v661, %v700
    %v706 = vtanh.pop %v704
    %v707 = vtanh.pop %v705
    %v708 = vxor.u32 %v704, 2147483648
    %v709 = vxor.u32 %v705, 2147483648
    %v710 = vmul.f32 %v708, 1.442695
    %v711 = vpow.pop %v710
    %v712 = vmul.f32 %v709, 1.442695
    %v713 = vpow.pop %v712
    %v714 = vadd.f32 %v711, 1.0
    %v715 = vadd.f32 %v713, 1.0
    %v716 = vrcp.pop %v714
    %v717 = vmul.f32 1.0, %v716
    %v718 = vrcp.pop %v715
    %v719 = vmul.f32 1.0, %v718
    %v720 = vsel %vm412, %v706, %v717
    %v721 = vsel %vm413, %v707, %v719
    %v722 = vmul.f32 %v720, %v721
    %v723 = vmul.f32 %v720, %v654
    %724 = vrot.lane.b32.xlu0 %v723, 64
    %v725 = vpop.permute.xlu0 %724
    %v726 = vadd.f32 %v722, %v725
    %727 = vrot.lane.b32.xlu0 %v726, 64
    %v728 = vpop.permute.xlu0 %727
    %v729 = vsel %vm414, %v726, %v728
    %730 = vrot.lane.b32.xlu0 %v721, 64
    %v731 = vpop.permute.xlu0 %730
    %v732 = vsel %vm414, %v731, %v721
    %v733 = vtanh.pop %v729
    %v734 = vmul.f32 %v732, %v733
    %v735 = vld [vmem:[#allocation2 + $0x60] sm:$0xff]
    %v736 = vld [vmem:[#allocation2 + $0x68] sm:$0xff]
    %v737 = vpack.c.bf16 %v734, %v734
    %738 = vmatprep.subr.bf16.mxu0 %v482
    %739 = vmatpush1.bf16.msra.mxu0 %v481
    %740 = vmatprep.subr.bf16.mxu0 %v484
    %741 = vmatpush1.bf16.msra.mxu0 %v483
    %742 = vmatprep.subr.bf16.mxu0 %v486
    %743 = vmatpush1.bf16.msra.mxu0 %v485
    %744 = vmatprep.subr.bf16.mxu0 %v488
    %745 = vmatpush1.bf16.msra.mxu0 %v487
    %746 = vmatprep.subr.bf16.mxu0 %v490
    %747 = vmatpush1.bf16.msra.mxu0 %v489
    %748 = vmatprep.subr.bf16.mxu0 %v492
    %749 = vmatpush1.bf16.msra.mxu0 %v491
    %750 = vmatprep.subr.bf16.mxu0 %v494
    %751 = vmatpush1.bf16.msra.mxu0 %v493
    %752 = vmatprep.subr.bf16.mxu0 %v496
    %753 = vmatpush1.bf16.msra.mxu0 %v495
    %754 = vmatprep.subr.bf16.mxu0 0
    %755 = vmatpush1.bf16.msra.mxu0 0
    %756 = vmatprep.subr.bf16.mxu0 0
    %757 = vmatpush1.bf16.msra.mxu0 0
    %758 = vmatprep.subr.bf16.mxu0 0
    %759 = vmatpush1.bf16.msra.mxu0 0
    %760 = vmatprep.subr.bf16.mxu0 0
    %761 = vmatpush1.bf16.msra.mxu0 0
    %762 = vmatprep.subr.bf16.mxu0 0
    %763 = vmatpush1.bf16.msra.mxu0 0
    %764 = vmatprep.subr.bf16.mxu0 0
    %765 = vmatpush1.bf16.msra.mxu0 0
    %766 = vmatprep.subr.bf16.mxu0 0
    %767 = vmatpush1.bf16.msra.mxu0 0
    %768 = vmatprep.subr.bf16.mxu0 0
    %769 = vmatpush1.bf16.msra.mxu0 0
    %770 = vmatprep.mubr.bf16.mxu0 0
    %771 = vmatmul.mubr.bf16.gmra.mrb[0].mxu0 %v737
    %v772 = vpop.f32.mrb[0].mxu0
    %v773 = vadd.f32 0.0, %v772
    %v774 = vpop.f32.mrb[0].mxu0
    %v775 = vadd.f32 0.0, %v774
    %v776 = vpop.f32.mrb[0].mxu0
    %v777 = vpop.f32.mrb[0].mxu0
    %778 = vdwg.mxu0
    %v779 = vadd.f32 %v735, %v773
    %v780 = vadd.f32 %v736, %v775
    %v781 = vtanh.pop %v779
    %v782 = vtanh.pop %v780
    %v783 = vxor.u32 %v779, 2147483648
    %v784 = vxor.u32 %v780, 2147483648
    %v785 = vmul.f32 %v783, 1.442695
    %v786 = vpow.pop %v785
    %v787 = vmul.f32 %v784, 1.442695
    %v788 = vpow.pop %v787
    %v789 = vadd.f32 %v786, 1.0
    %v790 = vadd.f32 %v788, 1.0
    %v791 = vrcp.pop %v789
    %v792 = vmul.f32 1.0, %v791
    %v793 = vrcp.pop %v790
    %v794 = vmul.f32 1.0, %v793
    %v795 = vsel %vm412, %v781, %v792
    %v796 = vsel %vm413, %v782, %v794
    %v797 = vmul.f32 %v795, %v796
    %v798 = vmul.f32 %v795, %v729
    %799 = vrot.lane.b32.xlu0 %v798, 64
    %v800 = vpop.permute.xlu0 %799
    %v801 = vadd.f32 %v797, %v800
    %802 = vrot.lane.b32.xlu0 %v801, 64
    %v803 = vpop.permute.xlu0 %802
    %v804 = vsel %vm414, %v801, %v803
    %805 = vrot.lane.b32.xlu0 %v796, 64
    %v806 = vpop.permute.xlu0 %805
    %v807 = vsel %vm414, %v806, %v796
    %v808 = vtanh.pop %v804
    %v809 = vmul.f32 %v807, %v808
    %v810 = vld [vmem:[#allocation2 + $0x80] sm:$0xff]
    %v811 = vld [vmem:[#allocation2 + $0x88] sm:$0xff]
    %v812 = vpack.c.bf16 %v809, %v809
    %813 = vmatprep.subr.bf16.mxu0 %v482
    %814 = vmatpush1.bf16.msra.mxu0 %v481
    %815 = vmatprep.subr.bf16.mxu0 %v484
    %816 = vmatpush1.bf16.msra.mxu0 %v483
    %817 = vmatprep.subr.bf16.mxu0 %v486
    %818 = vmatpush1.bf16.msra.mxu0 %v485
    %819 = vmatprep.subr.bf16.mxu0 %v488
    %820 = vmatpush1.bf16.msra.mxu0 %v487
    %821 = vmatprep.subr.bf16.mxu0 %v490
    %822 = vmatpush1.bf16.msra.mxu0 %v489
    %823 = vmatprep.subr.bf16.mxu0 %v492
    %824 = vmatpush1.bf16.msra.mxu0 %v491
    %825 = vmatprep.subr.bf16.mxu0 %v494
    %826 = vmatpush1.bf16.msra.mxu0 %v493
    %827 = vmatprep.subr.bf16.mxu0 %v496
    %828 = vmatpush1.bf16.msra.mxu0 %v495
    %829 = vmatprep.subr.bf16.mxu0 0
    %830 = vmatpush1.bf16.msra.mxu0 0
    %831 = vmatprep.subr.bf16.mxu0 0
    %832 = vmatpush1.bf16.msra.mxu0 0
    %833 = vmatprep.subr.bf16.mxu0 0
    %834 = vmatpush1.bf16.msra.mxu0 0
    %835 = vmatprep.subr.bf16.mxu0 0
    %836 = vmatpush1.bf16.msra.mxu0 0
    %837 = vmatprep.subr.bf16.mxu0 0
    %838 = vmatpush1.bf16.msra.mxu0 0
    %839 = vmatprep.subr.bf16.mxu0 0
    %840 = vmatpush1.bf16.msra.mxu0 0
    %841 = vmatprep.subr.bf16.mxu0 0
    %842 = vmatpush1.bf16.msra.mxu0 0
    %843 = vmatprep.subr.bf16.mxu0 0
    %844 = vmatpush1.bf16.msra.mxu0 0
    %845 = vmatprep.mubr.bf16.mxu0 0
    %846 = vmatmul.mubr.bf16.gmra.mrb[0].mxu0 %v812
    %v847 = vpop.f32.mrb[0].mxu0
    %v848 = vadd.f32 0.0, %v847
    %v849 = vpop.f32.mrb[0].mxu0
    %v850 = vadd.f32 0.0, %v849
    %v851 = vpop.f32.mrb[0].mxu0
    %v852 = vpop.f32.mrb[0].mxu0
    %853 = vdwg.mxu0
    %v854 = vadd.f32 %v810, %v848
    %v855 = vadd.f32 %v811, %v850
    %v856 = vtanh.pop %v854
    %v857 = vtanh.pop %v855
    %v858 = vxor.u32 %v854, 2147483648
    %v859 = vxor.u32 %v855, 2147483648
    %v860 = vmul.f32 %v858, 1.442695
    %v861 = vpow.pop %v860
    %v862 = vmul.f32 %v859, 1.442695
    %v863 = vpow.pop %v862
    %v864 = vadd.f32 %v861, 1.0
    %v865 = vadd.f32 %v863, 1.0
    %v866 = vrcp.pop %v864
    %v867 = vmul.f32 1.0, %v866
    %v868 = vrcp.pop %v865
    %v869 = vmul.f32 1.0, %v868
    %v870 = vsel %vm412, %v856, %v867
    %v871 = vsel %vm413, %v857, %v869
    %v872 = vmul.f32 %v870, %v871
    %v873 = vmul.f32 %v870, %v804
    %874 = vrot.lane.b32.xlu0 %v873, 64
    %v875 = vpop.permute.xlu0 %874
    %v876 = vadd.f32 %v872, %v875
    %877 = vrot.lane.b32.xlu0 %v876, 64
    %v878 = vpop.permute.xlu0 %877
    %v879 = vsel %vm414, %v876, %v878
    %880 = vrot.lane.b32.xlu0 %v871, 64
    %v881 = vpop.permute.xlu0 %880
    %v882 = vsel %vm414, %v881, %v871
    %v883 = vtanh.pop %v879
    %v884 = vmul.f32 %v882, %v883
    %v885 = vld [vmem:[#allocation2 + $0xa0] sm:$0xff]
    %v886 = vld [vmem:[#allocation2 + $0xa8] sm:$0xff]
    %v887 = vpack.c.bf16 %v884, %v884
    %888 = vmatprep.subr.bf16.mxu0 %v482
    %889 = vmatpush1.bf16.msra.mxu0 %v481
    %890 = vmatprep.subr.bf16.mxu0 %v484
    %891 = vmatpush1.bf16.msra.mxu0 %v483
    %892 = vmatprep.subr.bf16.mxu0 %v486
    %893 = vmatpush1.bf16.msra.mxu0 %v485
    %894 = vmatprep.subr.bf16.mxu0 %v488
    %895 = vmatpush1.bf16.msra.mxu0 %v487
    %896 = vmatprep.subr.bf16.mxu0 %v490
    %897 = vmatpush1.bf16.msra.mxu0 %v489
    %898 = vmatprep.subr.bf16.mxu0 %v492
    %899 = vmatpush1.bf16.msra.mxu0 %v491
    %900 = vmatprep.subr.bf16.mxu0 %v494
    %901 = vmatpush1.bf16.msra.mxu0 %v493
    %902 = vmatprep.subr.bf16.mxu0 %v496
    %903 = vmatpush1.bf16.msra.mxu0 %v495
    %904 = vmatprep.subr.bf16.mxu0 0
    %905 = vmatpush1.bf16.msra.mxu0 0
    %906 = vmatprep.subr.bf16.mxu0 0
    %907 = vmatpush1.bf16.msra.mxu0 0
    %908 = vmatprep.subr.bf16.mxu0 0
    %909 = vmatpush1.bf16.msra.mxu0 0
    %910 = vmatprep.subr.bf16.mxu0 0
    %911 = vmatpush1.bf16.msra.mxu0 0
    %912 = vmatprep.subr.bf16.mxu0 0
    %913 = vmatpush1.bf16.msra.mxu0 0
    %914 = vmatprep.subr.bf16.mxu0 0
    %915 = vmatpush1.bf16.msra.mxu0 0
    %916 = vmatprep.subr.bf16.mxu0 0
    %917 = vmatpush1.bf16.msra.mxu0 0
    %918 = vmatprep.subr.bf16.mxu0 0
    %919 = vmatpush1.bf16.msra.mxu0 0
    %920 = vmatprep.mubr.bf16.mxu0 0
    %921 = vmatmul.mubr.bf16.gmra.mrb[0].mxu0 %v887
    %v922 = vpop.f32.mrb[0].mxu0
    %v923 = vadd.f32 0.0, %v922
    %v924 = vpop.f32.mrb[0].mxu0
    %v925 = vadd.f32 0.0, %v924
    %v926 = vpop.f32.mrb[0].mxu0
    %v927 = vpop.f32.mrb[0].mxu0
    %928 = vdwg.mxu0
    %v929 = vadd.f32 %v885, %v923
    %v930 = vadd.f32 %v886, %v925
    %v931 = vtanh.pop %v929
    %v932 = vtanh.pop %v930
    %v933 = vxor.u32 %v929, 2147483648
    %v934 = vxor.u32 %v930, 2147483648
    %v935 = vmul.f32 %v933, 1.442695
    %v936 = vpow.pop %v935
    %v937 = vmul.f32 %v934, 1.442695
    %v938 = vpow.pop %v937
    %v939 = vadd.f32 %v936, 1.0
    %v940 = vadd.f32 %v938, 1.0
    %v941 = vrcp.pop %v939
    %v942 = vmul.f32 1.0, %v941
    %v943 = vrcp.pop %v940
    %v944 = vmul.f32 1.0, %v943
    %v945 = vsel %vm412, %v931, %v942
    %v946 = vsel %vm413, %v932, %v944
    %v947 = vmul.f32 %v945, %v946
    %v948 = vmul.f32 %v945, %v879
    %949 = vrot.lane.b32.xlu0 %v948, 64
    %v950 = vpop.permute.xlu0 %949
    %v951 = vadd.f32 %v947, %v950
    %952 = vrot.lane.b32.xlu0 %v951, 64
    %v953 = vpop.permute.xlu0 %952
    %v954 = vsel %vm414, %v951, %v953
    %955 = vrot.lane.b32.xlu0 %v946, 64
    %v956 = vpop.permute.xlu0 %955
    %v957 = vsel %vm414, %v956, %v946
    %v958 = vtanh.pop %v954
    %v959 = vmul.f32 %v957, %v958
    %v960 = vld [vmem:[#allocation2 + $0xc0] sm:$0xff]
    %v961 = vld [vmem:[#allocation2 + $0xc8] sm:$0xff]
    %v962 = vpack.c.bf16 %v959, %v959
    %963 = vmatprep.subr.bf16.mxu0 %v482
    %964 = vmatpush1.bf16.msra.mxu0 %v481
    %965 = vmatprep.subr.bf16.mxu0 %v484
    %966 = vmatpush1.bf16.msra.mxu0 %v483
    %967 = vmatprep.subr.bf16.mxu0 %v486
    %968 = vmatpush1.bf16.msra.mxu0 %v485
    %969 = vmatprep.subr.bf16.mxu0 %v488
    %970 = vmatpush1.bf16.msra.mxu0 %v487
    %971 = vmatprep.subr.bf16.mxu0 %v490
    %972 = vmatpush1.bf16.msra.mxu0 %v489
    %973 = vmatprep.subr.bf16.mxu0 %v492
    %974 = vmatpush1.bf16.msra.mxu0 %v491
    %975 = vmatprep.subr.bf16.mxu0 %v494
    %976 = vmatpush1.bf16.msra.mxu0 %v493
    %977 = vmatprep.subr.bf16.mxu0 %v496
    %978 = vmatpush1.bf16.msra.mxu0 %v495
    %979 = vmatprep.subr.bf16.mxu0 0
    %980 = vmatpush1.bf16.msra.mxu0 0
    %981 = vmatprep.subr.bf16.mxu0 0
    %982 = vmatpush1.bf16.msra.mxu0 0
    %983 = vmatprep.subr.bf16.mxu0 0
    %984 = vmatpush1.bf16.msra.mxu0 0
    %985 = vmatprep.subr.bf16.mxu0 0
    %986 = vmatpush1.bf16.msra.mxu0 0
    %987 = vmatprep.subr.bf16.mxu0 0
    %988 = vmatpush1.bf16.msra.mxu0 0
    %989 = vmatprep.subr.bf16.mxu0 0
    %990 = vmatpush1.bf16.msra.mxu0 0
    %991 = vmatprep.subr.bf16.mxu0 0
    %992 = vmatpush1.bf16.msra.mxu0 0
    %993 = vmatprep.subr.bf16.mxu0 0
    %994 = vmatpush1.bf16.msra.mxu0 0
    %995 = vmatprep.mubr.bf16.mxu0 0
    %996 = vmatmul.mubr.bf16.gmra.mrb[0].mxu0 %v962
    %v997 = vpop.f32.mrb[0].mxu0
    %v998 = vadd.f32 0.0, %v997
    %v999 = vpop.f32.mrb[0].mxu0
    %v1000 = vadd.f32 0.0, %v999
    %v1001 = vpop.f32.mrb[0].mxu0
    %v1002 = vpop.f32.mrb[0].mxu0
    %1003 = vdwg.mxu0
    %v1004 = vadd.f32 %v960, %v998
    %v1005 = vadd.f32 %v961, %v1000
    %v1006 = vtanh.pop %v1004
    %v1007 = vtanh.pop %v1005
    %v1008 = vxor.u32 %v1004, 2147483648
    %v1009 = vxor.u32 %v1005, 2147483648
    %v1010 = vmul.f32 %v1008, 1.442695
    %v1011 = vpow.pop %v1010
    %v1012 = vmul.f32 %v1009, 1.442695
    %v1013 = vpow.pop %v1012
    %v1014 = vadd.f32 %v1011, 1.0
    %v1015 = vadd.f32 %v1013, 1.0
    %v1016 = vrcp.pop %v1014
    %v1017 = vmul.f32 1.0, %v1016
    %v1018 = vrcp.pop %v1015
    %v1019 = vmul.f32 1.0, %v1018
    %v1020 = vsel %vm412, %v1006, %v1017
    %v1021 = vsel %vm413, %v1007, %v1019
    %v1022 = vmul.f32 %v1020, %v1021
    %v1023 = vmul.f32 %v1020, %v954
    %1024 = vrot.lane.b32.xlu0 %v1023, 64
    %v1025 = vpop.permute.xlu0 %1024
    %v1026 = vadd.f32 %v1022, %v1025
    %1027 = vrot.lane.b32.xlu0 %v1026, 64
    %v1028 = vpop.permute.xlu0 %1027
    %v1029 = vsel %vm414, %v1026, %v1028
    %1030 = vrot.lane.b32.xlu0 %v1021, 64
    %v1031 = vpop.permute.xlu0 %1030
    %v1032 = vsel %vm414, %v1031, %v1021
    %v1033 = vtanh.pop %v1029
    %v1034 = vmul.f32 %v1032, %v1033
    %v1035 = vld [vmem:[#allocation2 + $0xe0] sm:$0xff]
    %v1036 = vld [vmem:[#allocation2 + $0xe8] sm:$0xff]
    %v1037 = vpack.c.bf16 %v1034, %v1034
    %1038 = vmatprep.subr.bf16.mxu0 %v482
    %1039 = vmatpush1.bf16.msra.mxu0 %v481
    %1040 = vmatprep.subr.bf16.mxu0 %v484
    %1041 = vmatpush1.bf16.msra.mxu0 %v483
    %1042 = vmatprep.subr.bf16.mxu0 %v486
    %1043 = vmatpush1.bf16.msra.mxu0 %v485
    %1044 = vmatprep.subr.bf16.mxu0 %v488
    %1045 = vmatpush1.bf16.msra.mxu0 %v487
    %1046 = vmatprep.subr.bf16.mxu0 %v490
    %1047 = vmatpush1.bf16.msra.mxu0 %v489
    %1048 = vmatprep.subr.bf16.mxu0 %v492
    %1049 = vmatpush1.bf16.msra.mxu0 %v491
    %1050 = vmatprep.subr.bf16.mxu0 %v494
    %1051 = vmatpush1.bf16.msra.mxu0 %v493
    %1052 = vmatprep.subr.bf16.mxu0 %v496
    %1053 = vmatpush1.bf16.msra.mxu0 %v495
    %1054 = vmatprep.subr.bf16.mxu0 0
    %1055 = vmatpush1.bf16.msra.mxu0 0
    %1056 = vmatprep.subr.bf16.mxu0 0
    %1057 = vmatpush1.bf16.msra.mxu0 0
    %1058 = vmatprep.subr.bf16.mxu0 0
    %1059 = vmatpush1.bf16.msra.mxu0 0
    %1060 = vmatprep.subr.bf16.mxu0 0
    %1061 = vmatpush1.bf16.msra.mxu0 0
    %1062 = vmatprep.subr.bf16.mxu0 0
    %1063 = vmatpush1.bf16.msra.mxu0 0
    %1064 = vmatprep.subr.bf16.mxu0 0
    %1065 = vmatpush1.bf16.msra.mxu0 0
    %1066 = vmatprep.subr.bf16.mxu0 0
    %1067 = vmatpush1.bf16.msra.mxu0 0
    %1068 = vmatprep.subr.bf16.mxu0 0
    %1069 = vmatpush1.bf16.msra.mxu0 0
    %1070 = vmatprep.mubr.bf16.mxu0 0
    %1071 = vmatmul.mubr.bf16.gmra.mrb[0].mxu0 %v1037
    %v1072 = vpop.f32.mrb[0].mxu0
    %v1073 = vadd.f32 0.0, %v1072
    %v1074 = vpop.f32.mrb[0].mxu0
    %v1075 = vadd.f32 0.0, %v1074
    %v1076 = vpop.f32.mrb[0].mxu0
    %v1077 = vpop.f32.mrb[0].mxu0
    %1078 = vdwg.mxu0
    %v1079 = vadd.f32 %v1035, %v1073
    %v1080 = vadd.f32 %v1036, %v1075
    %v1081 = vtanh.pop %v1079
    %v1082 = vtanh.pop %v1080
    %v1083 = vxor.u32 %v1079, 2147483648
    %v1084 = vxor.u32 %v1080, 2147483648
    %v1085 = vmul.f32 %v1083, 1.442695
    %v1086 = vpow.pop %v1085
    %v1087 = vmul.f32 %v1084, 1.442695
    %v1088 = vpow.pop %v1087
    %v1089 = vadd.f32 %v1086, 1.0
    %v1090 = vadd.f32 %v1088, 1.0
    %v1091 = vrcp.pop %v1089
    %v1092 = vmul.f32 1.0, %v1091
    %v1093 = vrcp.pop %v1090
    %v1094 = vmul.f32 1.0, %v1093
    %v1095 = vsel %vm412, %v1081, %v1092
    %v1096 = vsel %vm413, %v1082, %v1094
    %v1097 = vmul.f32 %v1095, %v1096
    %v1098 = vmul.f32 %v1095, %v1029
    %1099 = vrot.lane.b32.xlu0 %v1098, 64
    %v1100 = vpop.permute.xlu0 %1099
    %v1101 = vadd.f32 %v1097, %v1100
    %1102 = vrot.lane.b32.xlu0 %v1101, 64
    %v1103 = vpop.permute.xlu0 %1102
    %v1104 = vsel %vm414, %v1101, %v1103
    %1105 = vrot.lane.b32.xlu0 %v1096, 64
    %v1106 = vpop.permute.xlu0 %1105
    %v1107 = vsel %vm414, %v1106, %v1096
    %v1108 = vtanh.pop %v1104
    %v1109 = vmul.f32 %v1107, %v1108
    %v1110 = vpack.c.bf16 %v659, %v584
    %v1111 = vpack.c.bf16 %v809, %v734
    %v1112 = vpack.c.bf16 %v959, %v884
    %v1113 = vpack.c.bf16 %v1109, %v1034
    %v1114 = vld [vmem:[%s4] sm:$0xf]
    %v1115 = vld [vmem:[%s4 + $0x4] sm:$0xf]
    %v1116 = vld [vmem:[%s4 + $0x8] sm:$0xf]
    %v1117 = vld [vmem:[%s4 + $0xc] sm:$0xf]
    %v1122 = vunpack.c.l.b16 %v1114
    %v1123 = vunpack.c.l.b16 %v1115
    %v1124 = vunpack.c.l.b16 %v1116
    %v1125 = vunpack.c.l.b16 %v1117
    %v1126 = vpack.c.b16 %v1123, %v1122
    %v1127 = vpack.c.b16 %v1125, %v1124
    %vm1128 = vcmask 523264
    %v1130 = vsel %vm1128, %v1126, 0
    %v1133 = vsel %vm1128, %v1127, 0
    %1135 = vmatprep.subr.bf16.mxu0 0
    %1136 = vmatpush1.bf16.msra.mxu0 %v1110
    %1137 = vmatprep.subr.bf16.mxu0 0
    %1138 = vmatpush1.bf16.msra.mxu0 %v1111
    %1139 = vmatprep.subr.bf16.mxu0 0
    %1140 = vmatpush1.bf16.msra.mxu0 %v1112
    %1141 = vmatprep.subr.bf16.mxu0 0
    %1142 = vmatpush1.bf16.msra.mxu0 %v1113
    %1143 = vmatprep.subr.bf16.mxu0 0
    %1144 = vmatpush1.bf16.msra.mxu0 0
    %1145 = vmatprep.subr.bf16.mxu0 0
    %1146 = vmatpush1.bf16.msra.mxu0 0
    %1147 = vmatprep.subr.bf16.mxu0 0
    %1148 = vmatpush1.bf16.msra.mxu0 0
    %1149 = vmatprep.subr.bf16.mxu0 0
    %1150 = vmatpush1.bf16.msra.mxu0 0
    %1151 = vmatprep.subr.bf16.mxu0 0
    %1152 = vmatpush1.bf16.msra.mxu0 0
    %1153 = vmatprep.subr.bf16.mxu0 0
    %1154 = vmatpush1.bf16.msra.mxu0 0
    %1155 = vmatprep.subr.bf16.mxu0 0
    %1156 = vmatpush1.bf16.msra.mxu0 0
    %1157 = vmatprep.subr.bf16.mxu0 0
    %1158 = vmatpush1.bf16.msra.mxu0 0
    %1159 = vmatprep.subr.bf16.mxu0 0
    %1160 = vmatpush1.bf16.msra.mxu0 0
    %1161 = vmatprep.subr.bf16.mxu0 0
    %1162 = vmatpush1.bf16.msra.mxu0 0
    %1163 = vmatprep.subr.bf16.mxu0 0
    %1164 = vmatpush1.bf16.msra.mxu0 0
    %1165 = vmatprep.subr.bf16.mxu0 0
    %1166 = vmatpush1.bf16.msra.mxu0 0
    %1167 = vmatprep.mubr.bf16.mxu0 0
    %1168 = vmatmul.mubr.bf16.gmra.mrb[0].mxu0 %v1130
    %v1169 = vpop.f32.mrb[0].mxu0
    %v1170 = vadd.f32 0.0, %v1169
    %v1171 = vpop.f32.mrb[0].mxu0
    %v1172 = vpop.f32.mrb[0].mxu0
    %v1173 = vadd.f32 0.0, %v1172
    %v1174 = vpop.f32.mrb[0].mxu0
    %1175 = vmatprep.mubr.bf16.mxu0 0
    %1176 = vmatmul.mubr.bf16.gmra.mrb[0].mxu0 %v1133
    %v1177 = vpop.f32.mrb[0].mxu0
    %v1178 = vadd.f32 0.0, %v1177
    %v1179 = vpop.f32.mrb[0].mxu0
    %v1180 = vpop.f32.mrb[0].mxu0
    %v1181 = vadd.f32 0.0, %v1180
    %v1182 = vpop.f32.mrb[0].mxu0
    %1183 = vdwg.mxu0
    %vm1184 = vcmp.lt.s32.totalorder %v406, 32
    %v1185 = vsel %vm1184, %v1170, %v1178
    %v1186 = vsel %vm1184, %v1173, %v1181
    %v1187 = vpack.c.bf16 %v1186, %v1185
    %v1188 = vld [vmem:[%s5] sm:$0xf]
    %v1189 = vld [vmem:[%s5 + $0x4] sm:$0xf]
    %v1190 = vld [vmem:[%s5 + $0x8] sm:$0xf]
    %v1191 = vld [vmem:[%s5 + $0xc] sm:$0xf]
    %v1192 = vld [vmem:[%s5 + $0x10] sm:$0xf]
    %v1193 = vld [vmem:[%s5 + $0x14] sm:$0xf]
    %v1194 = vld [vmem:[%s5 + $0x18] sm:$0xf]
    %v1195 = vld [vmem:[%s5 + $0x1c] sm:$0xf]
    %v1196 = vld [vmem:[%s5 + $0x20] sm:$0xf]
    %v1197 = vld [vmem:[%s5 + $0x24] sm:$0xf]
    %v1198 = vld [vmem:[%s5 + $0x28] sm:$0xf]
    %v1199 = vld [vmem:[%s5 + $0x2c] sm:$0xf]
    %v1200 = vld [vmem:[%s5 + $0x30] sm:$0xf]
    %v1201 = vld [vmem:[%s5 + $0x34] sm:$0xf]
    %v1202 = vld [vmem:[%s5 + $0x38] sm:$0xf]
    %v1203 = vld [vmem:[%s5 + $0x3c] sm:$0xf]
    %v1220 = vunpack.c.l.b16 %v1188
    %v1221 = vunpack.c.l.b16 %v1189
    %v1222 = vunpack.c.l.b16 %v1190
    %v1223 = vunpack.c.l.b16 %v1191
    %v1224 = vunpack.c.l.b16 %v1192
    %v1225 = vunpack.c.l.b16 %v1193
    %v1226 = vunpack.c.l.b16 %v1194
    %v1227 = vunpack.c.l.b16 %v1195
    %v1228 = vunpack.c.l.b16 %v1196
    %v1229 = vunpack.c.l.b16 %v1197
    %v1230 = vunpack.c.l.b16 %v1198
    %v1231 = vunpack.c.l.b16 %v1199
    %v1232 = vunpack.c.l.b16 %v1200
    %v1233 = vunpack.c.l.b16 %v1201
    %v1234 = vunpack.c.l.b16 %v1202
    %v1235 = vunpack.c.l.b16 %v1203
    %v1236 = vpack.c.b16 %v1221, %v1220
    %v1237 = vpack.c.b16 %v1223, %v1222
    %v1238 = vpack.c.b16 %v1225, %v1224
    %v1239 = vpack.c.b16 %v1227, %v1226
    %v1240 = vpack.c.b16 %v1229, %v1228
    %v1241 = vpack.c.b16 %v1231, %v1230
    %v1242 = vpack.c.b16 %v1233, %v1232
    %v1243 = vpack.c.b16 %v1235, %v1234
    %1252 = vmatprep.subr.bf16.mxu0 0
    %1253 = vmatpush1.bf16.msra.mxu0 %v1236
    %1254 = vmatprep.subr.bf16.mxu0 0
    %1255 = vmatpush1.bf16.msra.mxu0 %v1237
    %1256 = vmatprep.subr.bf16.mxu0 0
    %1257 = vmatpush1.bf16.msra.mxu0 %v1238
    %1258 = vmatprep.subr.bf16.mxu0 0
    %1259 = vmatpush1.bf16.msra.mxu0 %v1239
    %1260 = vmatprep.subr.bf16.mxu0 0
    %1261 = vmatpush1.bf16.msra.mxu0 %v1240
    %1262 = vmatprep.subr.bf16.mxu0 0
    %1263 = vmatpush1.bf16.msra.mxu0 %v1241
    %1264 = vmatprep.subr.bf16.mxu0 0
    %1265 = vmatpush1.bf16.msra.mxu0 %v1242
    %1266 = vmatprep.subr.bf16.mxu0 0
    %1267 = vmatpush1.bf16.msra.mxu0 %v1243
    %1268 = vmatprep.subr.bf16.mxu0 0
    %1269 = vmatpush1.bf16.msra.mxu0 0
    %1270 = vmatprep.subr.bf16.mxu0 0
    %1271 = vmatpush1.bf16.msra.mxu0 0
    %1272 = vmatprep.subr.bf16.mxu0 0
    %1273 = vmatpush1.bf16.msra.mxu0 0
    %1274 = vmatprep.subr.bf16.mxu0 0
    %1275 = vmatpush1.bf16.msra.mxu0 0
    %1276 = vmatprep.subr.bf16.mxu0 0
    %1277 = vmatpush1.bf16.msra.mxu0 0
    %1278 = vmatprep.subr.bf16.mxu0 0
    %1279 = vmatpush1.bf16.msra.mxu0 0
    %1280 = vmatprep.subr.bf16.mxu0 0
    %1281 = vmatpush1.bf16.msra.mxu0 0
    %1282 = vmatprep.subr.bf16.mxu0 0
    %1283 = vmatpush1.bf16.msra.mxu0 0
    %1284 = vmatprep.mubr.bf16.mxu0 0
    %1285 = vmatmul.mubr.bf16.gmra.mrb[0].mxu0 %v1187
    %v1286 = vpop.f32.mrb[0].mxu0
    %v1287 = vadd.f32 0.0, %v1286
    %v1288 = vpop.f32.mrb[0].mxu0
    %v1289 = vpop.f32.mrb[0].mxu0
    %v1290 = vadd.f32 0.0, %v1289
    %v1291 = vpop.f32.mrb[0].mxu0
    %1292 = vdwg.mxu0
    %v1293 = vtanh.pop %v1287
    %v1294 = vtanh.pop %v1290
    %v1295 = vld [vmem:[%s6] sm:$0xff]
    %v1296 = vld [vmem:[%s6 + $0x8] sm:$0xff]
    %vm1297 = vcmask 130048
    %v1299 = vsel %vm1297, %v1293, 0
    %v1302 = vsel %vm1297, %v1294, 0
    %1304 = vmatprep.subr.mxu0 0.0
    %1305 = vmatpush1.msra.mxu0 %v1295
    %1306 = vmatprep.subr.mxu0 0.0
    %1307 = vmatpush1.msra.mxu0 %v1296
    %1308 = vmatprep.subr.mxu0 0.0
    %1309 = vmatpush1.msra.mxu0 0.0
    %1310 = vmatprep.subr.mxu0 0.0
    %1311 = vmatpush1.msra.mxu0 0.0
    %1312 = vmatprep.subr.mxu0 0.0
    %1313 = vmatpush1.msra.mxu0 0.0
    %1314 = vmatprep.subr.mxu0 0.0
    %1315 = vmatpush1.msra.mxu0 0.0
    %1316 = vmatprep.subr.mxu0 0.0
    %1317 = vmatpush1.msra.mxu0 0.0
    %1318 = vmatprep.subr.mxu0 0.0
    %1319 = vmatpush1.msra.mxu0 0.0
    %1320 = vmatprep.subr.mxu0 0.0
    %1321 = vmatpush1.msra.mxu0 0.0
    %1322 = vmatprep.subr.mxu0 0.0
    %1323 = vmatpush1.msra.mxu0 0.0
    %1324 = vmatprep.subr.mxu0 0.0
    %1325 = vmatpush1.msra.mxu0 0.0
    %1326 = vmatprep.subr.mxu0 0.0
    %1327 = vmatpush1.msra.mxu0 0.0
    %1328 = vmatprep.subr.mxu0 0.0
    %1329 = vmatpush1.msra.mxu0 0.0
    %1330 = vmatprep.subr.mxu0 0.0
    %1331 = vmatpush1.msra.mxu0 0.0
    %1332 = vmatprep.subr.mxu0 0.0
    %1333 = vmatpush1.msra.mxu0 0.0
    %1334 = vmatprep.subr.mxu0 0.0
    %1335 = vmatpush1.msra.mxu0 0.0
    %1336 = vmatprep.subr.mxu0 0.0
    %1337 = vmatpush1.msra.mxu0 0.0
    %1338 = vmatprep.subr.mxu0 0.0
    %1339 = vmatpush1.msra.mxu0 0.0
    %1340 = vmatprep.subr.mxu0 0.0
    %1341 = vmatpush1.msra.mxu0 0.0
    %1342 = vmatprep.subr.mxu0 0.0
    %1343 = vmatpush1.msra.mxu0 0.0
    %1344 = vmatprep.subr.mxu0 0.0
    %1345 = vmatpush1.msra.mxu0 0.0
    %1346 = vmatprep.subr.mxu0 0.0
    %1347 = vmatpush1.msra.mxu0 0.0
    %1348 = vmatprep.subr.mxu0 0.0
    %1349 = vmatpush1.msra.mxu0 0.0
    %1350 = vmatprep.subr.mxu0 0.0
    %1351 = vmatpush1.msra.mxu0 0.0
    %1352 = vmatprep.subr.mxu0 0.0
    %1353 = vmatpush1.msra.mxu0 0.0
    %1354 = vmatprep.subr.mxu0 0.0
    %1355 = vmatpush1.msra.mxu0 0.0
    %1356 = vmatprep.subr.mxu0 0.0
    %1357 = vmatpush1.msra.mxu0 0.0
    %1358 = vmatprep.subr.mxu0 0.0
    %1359 = vmatpush1.msra.mxu0 0.0
    %1360 = vmatprep.subr.mxu0 0.0
    %1361 = vmatpush1.msra.mxu0 0.0
    %1362 = vmatprep.subr.mxu0 0.0
    %1363 = vmatpush1.msra.mxu0 0.0
    %1364 = vmatprep.subr.mxu0 0.0
    %1365 = vmatpush1.msra.mxu0 0.0
    %1366 = vmatprep.subr.mxu0 0.0
    %1367 = vmatpush1.msra.mxu0 0.0
    %1368 = vmatprep.mubr.f32.mxu0 0.0
    %1369 = vmatmul.mubr.f32.gmra.mrb[0].mxu0 %v1299
    %v1370 = vpop.f32.mrb[0].mxu0
    %v1371 = vadd.f32 0.0, %v1370
    %v1372 = vpop.f32.mrb[0].mxu0
    %1373 = vmatprep.mubr.f32.mxu0 0.0
    %1374 = vmatmul.mubr.f32.gmra.mrb[0].mxu0 %v1302
    %v1375 = vpop.f32.mrb[0].mxu0
    %v1376 = vadd.f32 0.0, %v1375
    %v1377 = vpop.f32.mrb[0].mxu0
    %1378 = vdwg.mxu0
    %v1379 = vld [vmem:[%s8] sm:$0x3]
    %v1380 = vld [vmem:[%s7] sm:$0xff]
    %v1381 = vld [vmem:[%s7 + $0x8] sm:$0xff]
    %v1382 = vmul.f32 %v1371, %v1380
    %v1383 = vmul.f32 %v1376, %v1381
    %v1385 = vsel %vm1297, %v1379, 0
    %1387 = vmatprep.subr.mxu0 0.0
    %1388 = vmatpush1.msra.mxu0 %v1382
    %1389 = vmatprep.subr.mxu0 0.0
    %1390 = vmatpush1.msra.mxu0 %v1383
    %1391 = vmatprep.subr.mxu0 0.0
    %1392 = vmatpush1.msra.mxu0 0.0
    %1393 = vmatprep.subr.mxu0 0.0
    %1394 = vmatpush1.msra.mxu0 0.0
    %1395 = vmatprep.subr.mxu0 0.0
    %1396 = vmatpush1.msra.mxu0 0.0
    %1397 = vmatprep.subr.mxu0 0.0
    %1398 = vmatpush1.msra.mxu0 0.0
    %1399 = vmatprep.subr.mxu0 0.0
    %1400 = vmatpush1.msra.mxu0 0.0
    %1401 = vmatprep.subr.mxu0 0.0
    %1402 = vmatpush1.msra.mxu0 0.0
    %1403 = vmatprep.subr.mxu0 0.0
    %1404 = vmatpush1.msra.mxu0 0.0
    %1405 = vmatprep.subr.mxu0 0.0
    %1406 = vmatpush1.msra.mxu0 0.0
    %1407 = vmatprep.subr.mxu0 0.0
    %1408 = vmatpush1.msra.mxu0 0.0
    %1409 = vmatprep.subr.mxu0 0.0
    %1410 = vmatpush1.msra.mxu0 0.0
    %1411 = vmatprep.subr.mxu0 0.0
    %1412 = vmatpush1.msra.mxu0 0.0
    %1413 = vmatprep.subr.mxu0 0.0
    %1414 = vmatpush1.msra.mxu0 0.0
    %1415 = vmatprep.subr.mxu0 0.0
    %1416 = vmatpush1.msra.mxu0 0.0
    %1417 = vmatprep.subr.mxu0 0.0
    %1418 = vmatpush1.msra.mxu0 0.0
    %1419 = vmatprep.subr.mxu0 0.0
    %1420 = vmatpush1.msra.mxu0 0.0
    %1421 = vmatprep.subr.mxu0 0.0
    %1422 = vmatpush1.msra.mxu0 0.0
    %1423 = vmatprep.subr.mxu0 0.0
    %1424 = vmatpush1.msra.mxu0 0.0
    %1425 = vmatprep.subr.mxu0 0.0
    %1426 = vmatpush1.msra.mxu0 0.0
    %1427 = vmatprep.subr.mxu0 0.0
    %1428 = vmatpush1.msra.mxu0 0.0
    %1429 = vmatprep.subr.mxu0 0.0
    %1430 = vmatpush1.msra.mxu0 0.0
    %1431 = vmatprep.subr.mxu0 0.0
    %1432 = vmatpush1.msra.mxu0 0.0
    %1433 = vmatprep.subr.mxu0 0.0
    %1434 = vmatpush1.msra.mxu0 0.0
    %1435 = vmatprep.subr.mxu0 0.0
    %1436 = vmatpush1.msra.mxu0 0.0
    %1437 = vmatprep.subr.mxu0 0.0
    %1438 = vmatpush1.msra.mxu0 0.0
    %1439 = vmatprep.subr.mxu0 0.0
    %1440 = vmatpush1.msra.mxu0 0.0
    %1441 = vmatprep.subr.mxu0 0.0
    %1442 = vmatpush1.msra.mxu0 0.0
    %1443 = vmatprep.subr.mxu0 0.0
    %1444 = vmatpush1.msra.mxu0 0.0
    %1445 = vmatprep.subr.mxu0 0.0
    %1446 = vmatpush1.msra.mxu0 0.0
    %1447 = vmatprep.subr.mxu0 0.0
    %1448 = vmatpush1.msra.mxu0 0.0
    %1449 = vmatprep.subr.mxu0 0.0
    %1450 = vmatpush1.msra.mxu0 0.0
    %1451 = vmatprep.mubr.f32.mxu0 0.0
    %1452 = vmatmul.mubr.f32.gmra.mrb[0].mxu0 %v1385
    %v1453 = vpop.f32.mrb[0].mxu0
    %v1454 = vadd.f32 0.0, %v1453
    %v1455 = vpop.f32.mrb[0].mxu0
    %1456 = vdwg.mxu0
    %vm1457 = vcmask 58368
    %v1458 = vsel %vm1457, %v1454, -inf
    %1459 = vmax.xlane.f32.xlu0 %v1458
    %v1460 = vpop.xlane.xlu0 %1459
    %v1461 = vsub.f32 %v1454, %v1460
    %v1462 = vmul.f32 %v1461, 1.442695
    %v1463 = vpow.pop %v1462
    %v1464 = vsel %vm1457, %v1463, 0.0
    %1465 = vadd.xlane.f32.xlu0 %v1464
    %v1466 = vpop.xlane.xlu0 %1465
    %v1467 = vrcp.pop %v1466
    %v1468 = vmul.f32 %v1463, %v1467
    %v1469 = vld [vmem:[%s9] sm:$0xff]
    %vm1470 = vcmask 64512
    %v1472 = vsel %vm1470, %v1468, 0
    %1474 = vmatprep.subr.mxu0 0.0
    %1475 = vmatpush1.msra.mxu0 %v1469
    %1476 = vmatprep.subr.mxu0 0.0
    %1477 = vmatpush1.msra.mxu0 0.0
    %1478 = vmatprep.subr.mxu0 0.0
    %1479 = vmatpush1.msra.mxu0 0.0
    %1480 = vmatprep.subr.mxu0 0.0
    %1481 = vmatpush1.msra.mxu0 0.0
    %1482 = vmatprep.subr.mxu0 0.0
    %1483 = vmatpush1.msra.mxu0 0.0
    %1484 = vmatprep.subr.mxu0 0.0
    %1485 = vmatpush1.msra.mxu0 0.0
    %1486 = vmatprep.subr.mxu0 0.0
    %1487 = vmatpush1.msra.mxu0 0.0
    %1488 = vmatprep.subr.mxu0 0.0
    %1489 = vmatpush1.msra.mxu0 0.0
    %1490 = vmatprep.subr.mxu0 0.0
    %1491 = vmatpush1.msra.mxu0 0.0
    %1492 = vmatprep.subr.mxu0 0.0
    %1493 = vmatpush1.msra.mxu0 0.0
    %1494 = vmatprep.subr.mxu0 0.0
    %1495 = vmatpush1.msra.mxu0 0.0
    %1496 = vmatprep.subr.mxu0 0.0
    %1497 = vmatpush1.msra.mxu0 0.0
    %1498 = vmatprep.subr.mxu0 0.0
    %1499 = vmatpush1.msra.mxu0 0.0
    %1500 = vmatprep.subr.mxu0 0.0
    %1501 = vmatpush1.msra.mxu0 0.0
    %1502 = vmatprep.subr.mxu0 0.0
    %1503 = vmatpush1.msra.mxu0 0.0
    %1504 = vmatprep.subr.mxu0 0.0
    %1505 = vmatpush1.msra.mxu0 0.0
    %1506 = vmatprep.subr.mxu0 0.0
    %1507 = vmatpush1.msra.mxu0 0.0
    %1508 = vmatprep.subr.mxu0 0.0
    %1509 = vmatpush1.msra.mxu0 0.0
    %1510 = vmatprep.subr.mxu0 0.0
    %1511 = vmatpush1.msra.mxu0 0.0
    %1512 = vmatprep.subr.mxu0 0.0
    %1513 = vmatpush1.msra.mxu0 0.0
    %1514 = vmatprep.subr.mxu0 0.0
    %1515 = vmatpush1.msra.mxu0 0.0
    %1516 = vmatprep.subr.mxu0 0.0
    %1517 = vmatpush1.msra.mxu0 0.0
    %1518 = vmatprep.subr.mxu0 0.0
    %1519 = vmatpush1.msra.mxu0 0.0
    %1520 = vmatprep.subr.mxu0 0.0
    %1521 = vmatpush1.msra.mxu0 0.0
    %1522 = vmatprep.subr.mxu0 0.0
    %1523 = vmatpush1.msra.mxu0 0.0
    %1524 = vmatprep.subr.mxu0 0.0
    %1525 = vmatpush1.msra.mxu0 0.0
    %1526 = vmatprep.subr.mxu0 0.0
    %1527 = vmatpush1.msra.mxu0 0.0
    %1528 = vmatprep.subr.mxu0 0.0
    %1529 = vmatpush1.msra.mxu0 0.0
    %1530 = vmatprep.subr.mxu0 0.0
    %1531 = vmatpush1.msra.mxu0 0.0
    %1532 = vmatprep.subr.mxu0 0.0
    %1533 = vmatpush1.msra.mxu0 0.0
    %1534 = vmatprep.subr.mxu0 0.0
    %1535 = vmatpush1.msra.mxu0 0.0
    %1536 = vmatprep.subr.mxu0 0.0
    %1537 = vmatpush1.msra.mxu0 0.0
    %1538 = vmatprep.mubr.f32.mxu0 0.0
    %1539 = vmatmul.mubr.f32.gmra.mrb[0].mxu0 %v1472
    %v1540 = vpop.f32.mrb[0].mxu0
    %v1541 = vadd.f32 0.0, %v1540
    %v1542 = vpop.f32.mrb[0].mxu0
    %1543 = vdwg.mxu0
    %v1544 = vld [vmem:[%s10] sm:$0x3]
    %v1545 = vmul.f32 %v1541, %v1544
    %v1546 = vpack.c.bf16 %v1545, %v1545
    %v1548 = vsel %vm1297, %v1546, 0
    %1550 = vmatprep.subr.bf16.mxu0 0
    %1551 = vmatpush1.bf16.msra.mxu0 %v1187
    %1552 = vmatprep.subr.bf16.mxu0 0
    %1553 = vmatpush1.bf16.msra.mxu0 0
    %1554 = vmatprep.subr.bf16.mxu0 0
    %1555 = vmatpush1.bf16.msra.mxu0 0
    %1556 = vmatprep.subr.bf16.mxu0 0
    %1557 = vmatpush1.bf16.msra.mxu0 0
    %1558 = vmatprep.subr.bf16.mxu0 0
    %1559 = vmatpush1.bf16.msra.mxu0 0
    %1560 = vmatprep.subr.bf16.mxu0 0
    %1561 = vmatpush1.bf16.msra.mxu0 0
    %1562 = vmatprep.subr.bf16.mxu0 0
    %1563 = vmatpush1.bf16.msra.mxu0 0
    %1564 = vmatprep.subr.bf16.mxu0 0
    %1565 = vmatpush1.bf16.msra.mxu0 0
    %1566 = vmatprep.subr.bf16.mxu0 0
    %1567 = vmatpush1.bf16.msra.mxu0 0
    %1568 = vmatprep.subr.bf16.mxu0 0
    %1569 = vmatpush1.bf16.msra.mxu0 0
    %1570 = vmatprep.subr.bf16.mxu0 0
    %1571 = vmatpush1.bf16.msra.mxu0 0
    %1572 = vmatprep.subr.bf16.mxu0 0
    %1573 = vmatpush1.bf16.msra.mxu0 0
    %1574 = vmatprep.subr.bf16.mxu0 0
    %1575 = vmatpush1.bf16.msra.mxu0 0
    %1576 = vmatprep.subr.bf16.mxu0 0
    %1577 = vmatpush1.bf16.msra.mxu0 0
    %1578 = vmatprep.subr.bf16.mxu0 0
    %1579 = vmatpush1.bf16.msra.mxu0 0
    %1580 = vmatprep.subr.bf16.mxu0 0
    %1581 = vmatpush1.bf16.msra.mxu0 0
    %1582 = vmatprep.mubr.bf16.mxu0 0
    %1583 = vmatmul.mubr.bf16.gmra.mrb[0].mxu0 %v1548
    %v1584 = vpop.f32.mrb[0].mxu0
    %v1585 = vadd.f32 0.0, %v1584
    %v1586 = vpop.f32.mrb[0].mxu0
    %v1587 = vpop.f32.mrb[0].mxu0
    %v1588 = vpop.f32.mrb[0].mxu0
    %1589 = vdwg.mxu0
    %v1590 = vpack.c.bf16 %v1585, %v1585
    %v1591 = vld [vmem:[%s11] sm:$0xf]
    %v1592 = vld [vmem:[%s11 + $0x4] sm:$0xf]
    %v1593 = vld [vmem:[%s11 + $0x8] sm:$0xf]
    %v1594 = vld [vmem:[%s11 + $0xc] sm:$0xf]
    %v1595 = vld [vmem:[%s11 + $0x10] sm:$0xf]
    %v1596 = vld [vmem:[%s11 + $0x14] sm:$0xf]
    %v1597 = vld [vmem:[%s11 + $0x18] sm:$0xf]
    %v1598 = vld [vmem:[%s11 + $0x1c] sm:$0xf]
    %v1599 = vld [vmem:[%s11 + $0x20] sm:$0xf]
    %v1600 = vld [vmem:[%s11 + $0x24] sm:$0xf]
    %v1601 = vld [vmem:[%s11 + $0x28] sm:$0xf]
    %v1602 = vld [vmem:[%s11 + $0x2c] sm:$0xf]
    %v1603 = vld [vmem:[%s11 + $0x30] sm:$0xf]
    %v1604 = vld [vmem:[%s11 + $0x34] sm:$0xf]
    %v1605 = vld [vmem:[%s11 + $0x38] sm:$0xf]
    %v1606 = vld [vmem:[%s11 + $0x3c] sm:$0xf]
    %v1607 = vld [vmem:[%s12] sm:$0x1]
    %v1609 = vlaneseq
    %v1610 = vshrl.u32 %v1609, 7
    %v1611 = vsub.s32 0, %v1610
    %v1612 = vrot.slane %v1607, %v1611
    %v1630 = vunpack.c.l.b16 %v1591
    %v1631 = vunpack.c.l.b16 %v1592
    %v1632 = vunpack.c.l.b16 %v1593
    %v1633 = vunpack.c.l.b16 %v1594
    %v1634 = vunpack.c.l.b16 %v1595
    %v1635 = vunpack.c.l.b16 %v1596
    %v1636 = vunpack.c.l.b16 %v1597
    %v1637 = vunpack.c.l.b16 %v1598
    %v1638 = vunpack.c.l.b16 %v1599
    %v1639 = vunpack.c.l.b16 %v1600
    %v1640 = vunpack.c.l.b16 %v1601
    %v1641 = vunpack.c.l.b16 %v1602
    %v1642 = vunpack.c.l.b16 %v1603
    %v1643 = vunpack.c.l.b16 %v1604
    %v1644 = vunpack.c.l.b16 %v1605
    %v1645 = vunpack.c.l.b16 %v1606
    %v1646 = vpack.c.b16 %v1631, %v1630
    %v1647 = vpack.c.b16 %v1633, %v1632
    %v1648 = vpack.c.b16 %v1635, %v1634
    %v1649 = vpack.c.b16 %v1637, %v1636
    %v1650 = vpack.c.b16 %v1639, %v1638
    %v1651 = vpack.c.b16 %v1641, %v1640
    %v1652 = vpack.c.b16 %v1643, %v1642
    %v1653 = vpack.c.b16 %v1645, %v1644
    %1662 = vmatprep.subr.bf16.mxu0 0
    %1663 = vmatpush1.bf16.msra.mxu0 %v1646
    %1664 = vmatprep.subr.bf16.mxu0 0
    %1665 = vmatpush1.bf16.msra.mxu0 %v1647
    %1666 = vmatprep.subr.bf16.mxu0 0
    %1667 = vmatpush1.bf16.msra.mxu0 %v1648
    %1668 = vmatprep.subr.bf16.mxu0 0
    %1669 = vmatpush1.bf16.msra.mxu0 %v1649
    %1670 = vmatprep.subr.bf16.mxu0 0
    %1671 = vmatpush1.bf16.msra.mxu0 %v1650
    %1672 = vmatprep.subr.bf16.mxu0 0
    %1673 = vmatpush1.bf16.msra.mxu0 %v1651
    %1674 = vmatprep.subr.bf16.mxu0 0
    %1675 = vmatpush1.bf16.msra.mxu0 %v1652
    %1676 = vmatprep.subr.bf16.mxu0 0
    %1677 = vmatpush1.bf16.msra.mxu0 %v1653
    %1678 = vmatprep.subr.bf16.mxu0 0
    %1679 = vmatpush1.bf16.msra.mxu0 0
    %1680 = vmatprep.subr.bf16.mxu0 0
    %1681 = vmatpush1.bf16.msra.mxu0 0
    %1682 = vmatprep.subr.bf16.mxu0 0
    %1683 = vmatpush1.bf16.msra.mxu0 0
    %1684 = vmatprep.subr.bf16.mxu0 0
    %1685 = vmatpush1.bf16.msra.mxu0 0
    %1686 = vmatprep.subr.bf16.mxu0 0
    %1687 = vmatpush1.bf16.msra.mxu0 0
    %1688 = vmatprep.subr.bf16.mxu0 0
    %1689 = vmatpush1.bf16.msra.mxu0 0
    %1690 = vmatprep.subr.bf16.mxu0 0
    %1691 = vmatpush1.bf16.msra.mxu0 0
    %1692 = vmatprep.subr.bf16.mxu0 0
    %1693 = vmatpush1.bf16.msra.mxu0 0
    %1694 = vmatprep.mubr.bf16.mxu0 0
    %1695 = vmatmul.mubr.bf16.gmra.mrb[0].mxu0 %v1590
    %v1696 = vpop.f32.mrb[0].mxu0
    %v1697 = vadd.f32 %v1612, %v1696
    %v1698 = vpop.f32.mrb[0].mxu0
    %v1699 = vpop.f32.mrb[0].mxu0
    %v1700 = vpop.f32.mrb[0].mxu0
    %1701 = vdwg.mxu0
    %vm1702 = vcmask 25600
    %1703 = vst.msk [vmem:[#allocation3] sm:$0x3] %vm1702, %v1697
    // Predicated region
    $region54: #{bilstm_attn_forward.1} parent=1 // pred_check
      _
    $region55: #{bilstm_attn_forward.1} parent=1 // pred_check_branch
      %1705 = sbr.rel (0) target = $region57
    $region56: #{bilstm_attn_forward.1} parent=1 // pred_region
      %s1707 = ssub.s32 32, 32
      %1708 = vsyncadd [#allocation4], %s1707
      %s1710 = sshll.u32 [#allocation3], 4
      %s1711 = int_to_ptr.vmem [resolvable:$true] %s1710
      %1713 = dma.vmem_to_hbm [thread:$0]  %s1711, 32, %s13, [#allocation4]
    $region57: #{bilstm_attn_forward.1} parent=1 // pred_fallthru
      _
    // Predicated region
    $region58: #{bilstm_attn_forward.1} parent=1 // pred_check
      _
    $region59: #{bilstm_attn_forward.1} parent=1 // pred_check_branch
      %1715 = sbr.rel (0) target = $region61
    $region60: #{bilstm_attn_forward.1} parent=1 // pred_region
      %1716 = dma.done [#allocation4], 32
    $region61: #{bilstm_attn_forward.1} parent=1 // pred_fallthru
      _
    %1717 = vsyncpa [#allocation4], 1

</llo_original>
